<compile_context>
chip_gen: v7x
topology: tpu7x:2x2x1
jax: 0.10.0
libtpu: 0.0.40
codegen_flags: <defaults>
</compile_context>

<pallas_src>
import functools

import jax
import jax.numpy as jnp
from jax.experimental import pallas as pl
from jax.experimental.pallas import tpu as pltpu

LANE = 128
NEG_INF = -1e30          # big-finite "minus infinity" for padded softmax columns


def _round_up(n, m):
    return ((n + m - 1) // m) * m


# ---------------------------------------------------------------------------
# Kernel
# ---------------------------------------------------------------------------
def make_rainbow_kernel(num_hidden: int, out_dim: int, atom_pad: int, act_dtype):
    """Pallas kernel for one batch tile of the fused RainbowNet forward."""

    def kernel(*refs):
        # refs: x, w_in, b_in, [w_h, b_h]*num_hidden,
        #       w_branch, b_branch, w_q, b_q, bcast, bsum, sup, q_out
        x_ref, w_in_ref, b_in_ref = refs[0], refs[1], refs[2]
        idx = 3
        hidden_refs = refs[idx:idx + 2 * num_hidden]
        idx += 2 * num_hidden
        (w_branch_ref, b_branch_ref, w_q_ref, b_q_ref,
         bcast_ref, bsum_ref, sup_ref) = refs[idx:idx + 7]
        q_out_ref = refs[idx + 7]

        def linear_relu(a, w_ref, b_ref):
            # MXU matmul with f32 accumulation; bias-add + relu in f32
            # (v5e-safe), activations kept in act_dtype (bf16) between layers.
            y = jnp.dot(a, w_ref[...], preferred_element_type=jnp.float32)
            return jnp.maximum(y + b_ref[...], 0.0).astype(act_dtype)

        # ---- trunk -------------------------------------------------------
        h = linear_relu(x_ref[...].astype(w_in_ref.dtype), w_in_ref, b_in_ref)
        for l in range(num_hidden):
            h = linear_relu(h, hidden_refs[2 * l], hidden_refs[2 * l + 1])

        # ---- fused dueling branches: [adv_hid | val_hid] in ONE matmul ----
        branch = linear_relu(h, w_branch_ref, b_branch_ref)

        # ---- fused dueling head: q_atoms for ALL actions in ONE matmul ----
        # w_q / b_q fold the advantage head, value head, mean-over-actions
        # subtraction and value broadcast; padded atom columns carry NEG_INF
        # bias so exp() makes them vanish from the softmax.
        q_all = (jnp.dot(branch, w_q_ref[...], preferred_element_type=jnp.float32)
                 + b_q_ref[...])                       # (TB, out_dim * atom_pad)

        # ---- per-action stabilized exponentials on clean 128-lane blocks --
        # Each slice is tile-aligned (atom_pad == 128k), so there are no lane
        # relayouts and no masked XLU reductions; no VALU accumulation loop.
        e_blocks = []
        for a in range(out_dim):
            blk = q_all[:, a * atom_pad:(a + 1) * atom_pad]
            m_a = jnp.max(blk, axis=-1, keepdims=True)   # per-action max (XLU)
            e_blocks.append(jnp.exp(blk - m_a))
        e = jnp.concatenate(e_blocks, axis=-1)           # 128-aligned lane concat

        # ---- denominators / broadcast on the otherwise-idle MXU -----------
        s_cols = jnp.dot(e, bsum_ref[...],
                         preferred_element_type=jnp.float32)      # (TB, o_sub)
        inv_bcast = jnp.dot(pl.reciprocal(s_cols, approx=True), bcast_ref[...],
                            preferred_element_type=jnp.float32)   # (TB, OA_pad)
        dist = jnp.maximum(e * inv_bcast, 0.001)         # softmax + clamp(min=0.001)

        # ---- support contraction as ONE matmul + lane-dense (TB,128) store -
        q_out_ref[...] = jnp.dot(
            dist, sup_ref[...], preferred_element_type=jnp.float32
        ).astype(q_out_ref.dtype)

    return kernel


# ---------------------------------------------------------------------------
# Wrapper-side parameter fusion + lane padding
# ---------------------------------------------------------------------------
def build_fused_params(params, *, out_dim, atom_size, compute_dtype=jnp.bfloat16):
    """Fuse branch/head weights, fold the dueling combine into one matrix and
    lane-pad every feature dimension to multiples of 128."""
    f32 = jnp.float32
    in_dim, H = params["w_in"].shape
    A, O = atom_size, out_dim
    OA = O * A
    d_pad = _round_up(in_dim, LANE)
    h_pad = _round_up(H, LANE)
    a_pad = _round_up(A, LANE)         # each action's atom block -> full lane group
    o_pad = _round_up(O, LANE)         # lane-dense q output
    o_sub = max(8, _round_up(O, 8))    # small helper tiles, sublane-aligned
    oa_pad = O * a_pad

    def pad2(m, r, c):
        return jnp.zeros((r, c), f32).at[:m.shape[0], :m.shape[1]].set(m.astype(f32))

    # trunk
    w_in = pad2(params["w_in"], d_pad, h_pad)
    b_in = pad2(params["b_in"], 1, h_pad)
    hidden = [(pad2(w, h_pad, h_pad), pad2(b, 1, h_pad))
              for (w, b) in params["hidden"]]

    # fused advantage/value hidden branch: (h_pad, 2*h_pad)
    w_branch = jnp.concatenate([pad2(params["w_advh"], h_pad, h_pad),
                                pad2(params["w_valh"], h_pad, h_pad)], axis=1)
    b_branch = jnp.concatenate([pad2(params["b_advh"], 1, h_pad),
                                pad2(params["b_valh"], 1, h_pad)], axis=1)

    # dueling head fold (unpadded math, identical to the reference):
    #   q_atoms = val + adv - adv.mean(actions)  ==  [adv_hid|val_hid] @ w_q + b_q
    w_head = jnp.zeros((2 * H, OA + A), f32)
    w_head = w_head.at[:H, :OA].set(params["w_adv"].astype(f32))
    w_head = w_head.at[H:, OA:].set(params["w_val"].astype(f32))
    b_head = jnp.concatenate([params["b_adv"], params["b_val"]], axis=1).astype(f32)
    a_mean = jnp.kron(jnp.ones((O, 1), f32), jnp.eye(A, dtype=f32)) / O   # (OA, A)
    t_tile = jnp.kron(jnp.ones((1, O), f32), jnp.eye(A, dtype=f32))       # (A, OA)
    q_mat = jnp.concatenate(
        [jnp.eye(OA, dtype=f32) - a_mean @ t_tile, t_tile], axis=0)       # (OA+A, OA)
    w_q = w_head @ q_mat                                                  # (2H, OA)
    b_q = b_head @ q_mat                                                  # (1, OA)

    # scatter rows into the padded [adv_hid | val_hid] activation layout
    w_q_rows = jnp.zeros((2 * h_pad, OA), f32)
    w_q_rows = w_q_rows.at[:H, :].set(w_q[:H])
    w_q_rows = w_q_rows.at[h_pad:h_pad + H, :].set(w_q[H:])

    # scatter columns into 128-lane atom blocks; padded columns: 0 weight,
    # NEG_INF bias (exp -> 0 in the softmax) and 0 support (0 in Q).
    def scatter_atom_blocks(m, fill):
        out = jnp.full((m.shape[0], oa_pad), fill, f32)
        for o in range(O):
            out = out.at[:, o * a_pad:o * a_pad + A].set(m[:, o * A:(o + 1) * A])
        return out

    w_q_pad = scatter_atom_blocks(w_q_rows, 0.0)      # (2*h_pad, oa_pad)
    b_q_pad = scatter_atom_blocks(b_q, NEG_INF)       # (1, oa_pad)

    # constant epilogue matrices (per-action block broadcast / sum / support)
    blk = jnp.kron(jnp.eye(O, dtype=f32), jnp.ones((1, a_pad), f32))      # (O, oa_pad)
    bcast = jnp.zeros((o_sub, oa_pad), f32).at[:O].set(blk)               # (o_sub, oa_pad)
    # padded bsum columns re-use block 0 so every denominator stays > 0
    bsum = jnp.tile(blk[:1].T, (1, o_sub)).at[:, :O].set(blk.T)           # (oa_pad, o_sub)
    sup = params["support"].reshape(A).astype(f32)
    sup_block = jnp.zeros((oa_pad, o_pad), f32)                           # (oa_pad, o_pad)
    for o in range(O):
        sup_block = sup_block.at[o * a_pad:o * a_pad + A, o].set(sup)

    cd = compute_dtype
    fused = {
        "w_in": w_in.astype(cd), "b_in": b_in,
        "hidden": [(w.astype(cd), b) for (w, b) in hidden],
        "w_branch": w_branch.astype(cd), "b_branch": b_branch,
        "w_q": w_q_pad.astype(cd), "b_q": b_q_pad,
        "bcast": bcast, "bsum": bsum, "sup": sup_block,
    }
    meta = {"out_dim": O, "atom_pad": a_pad}
    return fused, meta


# ---------------------------------------------------------------------------
# pallas_call wrapper
# ---------------------------------------------------------------------------
def _pick_block_batch():
    """Per-generation batch-tile default (VMEM budget vs per-step overhead)."""
    try:
        kind = jax.devices()[0].device_kind.lower()
    except Exception:
        return 256
    if "v5" in kind:
        return 256       # smaller scoped-VMEM default on v5e
    if "v6" in kind:
        return 512       # 128 MiB VMEM: bigger tiles cut per-step overhead
    return 256           # v7x & others: 64 MiB VMEM, 2 TCs -> modest tiles


def rainbow_forward(fused, x, *, out_dim, atom_pad, block_batch=None):
    """Fused RainbowNet forward over a 1-D batch grid; returns (B, out_dim) Q."""
    B, in_dim = x.shape
    d_pad = fused["w_in"].shape[0]
    o_pad = fused["sup"].shape[1]
    num_hidden = len(fused["hidden"])
    act_dtype = fused["w_in"].dtype

    # lane-dense input: pad features to a multiple of 128
    if in_dim != d_pad:
        x = jnp.pad(x, ((0, 0), (0, d_pad - in_dim)))

    if block_batch is None:
        block_batch = _pick_block_batch()
    TB = min(block_batch, B)
    if TB != B:
        TB = max(8, (TB // 8) * 8)
    # v7x has 2 TensorCores: make sure the parallel batch grid has >= 2 steps
    if B > 8 and pl.cdiv(B, TB) < 2:
        TB = max(8, (((B + 1) // 2 + 7) // 8) * 8)
    grid = (pl.cdiv(B, TB),)

    inputs = [x, fused["w_in"], fused["b_in"]]
    for w, b in fused["hidden"]:
        inputs.extend([w, b])
    inputs.extend([fused["w_branch"], fused["b_branch"],
                   fused["w_q"], fused["b_q"],
                   fused["bcast"], fused["bsum"], fused["sup"]])

    def resident(arr):
        # Full-array block, same block index every grid step -> stays VMEM
        # resident (no re-DMA across batch tiles).
        return pl.BlockSpec(arr.shape, lambda i: (0,) * arr.ndim)

    in_specs = [pl.BlockSpec((TB, d_pad), lambda i: (i, 0))]
    in_specs += [resident(a) for a in inputs[1:]]
    out_specs = pl.BlockSpec((TB, o_pad), lambda i: (i, 0))

    # Explicit VMEM budget: resident weights (x2 pipeline buffers) + act tiles.
    resident_bytes = sum(int(a.size) * a.dtype.itemsize for a in inputs[1:])
    tile_bytes = TB * d_pad * x.dtype.itemsize + TB * o_pad * 4
    vmem_need = 2 * (resident_bytes + tile_bytes) + (16 << 20)
    vmem_limit = int(min(max(vmem_need, 32 << 20), 60 << 20))

    kernel = make_rainbow_kernel(num_hidden, out_dim, atom_pad, act_dtype)
    q_pad = pl.pallas_call(
        kernel,
        out_shape=jax.ShapeDtypeStruct((B, o_pad), jnp.float32),
        grid=grid,
        in_specs=in_specs,
        out_specs=out_specs,
        compiler_params=pltpu.CompilerParams(
            dimension_semantics=("parallel",),
            vmem_limit_bytes=vmem_limit),
    )(*inputs)
    return q_pad[:, :out_dim]


# ---------------------------------------------------------------------------
# Reference (pure JAX) + init helpers
# ---------------------------------------------------------------------------
def init_linear(key, fan_in, fan_out):
    """Deterministic torch.nn.Linear-style init, weight stored as (in, out)."""
    kw, kb = jax.random.split(key)
    bound = 1.0 / (fan_in ** 0.5)
    w = jax.random.uniform(kw, (fan_in, fan_out), jnp.float32, -bound, bound)
    b = jax.random.uniform(kb, (1, fan_out), jnp.float32, -bound, bound)
    return w, b


def reference_forward(params, x, *, out_dim, atom_size):
    """Pure-JAX reference mirroring RainbowNet.forward (dueling, noisy=False)."""
    h = jax.nn.relu(x @ params["w_in"] + params["b_in"])
    for w, b in params["hidden"]:
        h = jax.nn.relu(h @ w + b)
    adv_hid = jax.nn.relu(h @ params["w_advh"] + params["b_advh"])
    val_hid = jax.nn.relu(h @ params["w_valh"] + params["b_valh"])
    adv = (adv_hid @ params["w_adv"] + params["b_adv"]).reshape(-1, out_dim, atom_size)
    val = (val_hid @ params["w_val"] + params["b_val"]).reshape(-1, 1, atom_size)
    q_atoms = val + adv - adv.mean(axis=1, keepdims=True)
    dist = jax.nn.softmax(q_atoms, axis=-1)
    dist = jnp.maximum(dist, 0.001)            # clamp(min=0.001)
    return jnp.sum(dist * params["support"].reshape(1, 1, atom_size), axis=2)


if __name__ == "__main__":
    # Small shapes consistent with the module.
    batch = 8
    input_dim = 16
    hidden_dim = 32
    output_dim = 4
    atom_size = 8
    depth = 2                      # -> depth - 1 = 1 extra hidden layer
    num_hidden = depth - 1

    key = jax.random.PRNGKey(0)
    keys = jax.random.split(key, 16)

    params = {}
    params["w_in"], params["b_in"] = init_linear(keys[0], input_dim, hidden_dim)
    params["hidden"] = [init_linear(keys[1 + i], hidden_dim, hidden_dim)
                        for i in range(num_hidden)]
    params["w_advh"], params["b_advh"] = init_linear(keys[8], hidden_dim, hidden_dim)
    params["w_valh"], params["b_valh"] = init_linear(keys[9], hidden_dim, hidden_dim)
    params["w_adv"], params["b_adv"] = init_linear(keys[10], hidden_dim,
                                                   output_dim * atom_size)
    params["w_val"], params["b_val"] = init_linear(keys[11], hidden_dim, atom_size)
    params["support"] = jnp.linspace(0.0, 10.0, atom_size,
                                     dtype=jnp.float32).reshape(1, atom_size)

    x = jax.random.normal(keys[12], (batch, input_dim), dtype=jnp.float32)
    q_ref = reference_forward(params, x, out_dim=output_dim, atom_size=atom_size)

    # --- f32 weights: numerical check (approx reciprocal on the EUP keeps ---
    # --- per-action normalization only ~1e-3-exact, hence 2e-2 tolerance) ---
    fused_f32, meta = build_fused_params(params, out_dim=output_dim,
                                         atom_size=atom_size,
                                         compute_dtype=jnp.float32)
    fwd = jax.jit(functools.partial(rainbow_forward, **meta))
    q = fwd(fused_f32, x)
    jax.block_until_ready(q)
    assert q.shape == (batch, output_dim)
    assert bool(jnp.all(jnp.isfinite(q)))
    assert bool(jnp.allclose(q, q_ref, rtol=2e-2, atol=2e-2)), (
        f"f32 mismatch, max abs err = {float(jnp.max(jnp.abs(q - q_ref)))}")

    # --- bf16 weights/activations (recommended default on v5e/v6e/v7x:   ---
    # --- halves weight DMA + resident VMEM; softmax math stays f32)      ---
    fused_bf16, _ = build_fused_params(params, out_dim=output_dim,
                                       atom_size=atom_size,
                                       compute_dtype=jnp.bfloat16)
    q_bf16 = fwd(fused_bf16, x)
    jax.block_until_ready(q_bf16)
    assert q_bf16.shape == (batch, output_dim)
    assert bool(jnp.all(jnp.isfinite(q_bf16)))
    assert bool(jnp.allclose(q_bf16, q_ref, rtol=5e-2, atol=5e-2)), (
        f"bf16 mismatch, max abs err = {float(jnp.max(jnp.abs(q_bf16 - q_ref)))}")

    print("KERNEL_OK")
</pallas_src>

<mosaic_0001>
module attributes {stable_mosaic.version = 11 : i64} {
  func.func @kernel(%arg0: i32, %arg1: memref<8x128xf32, #tpu.memory_space<vmem>>, %arg2: memref<128x128xf32, #tpu.memory_space<vmem>>, %arg3: memref<1x128xf32, #tpu.memory_space<vmem>>, %arg4: memref<128x128xf32, #tpu.memory_space<vmem>>, %arg5: memref<1x128xf32, #tpu.memory_space<vmem>>, %arg6: memref<128x256xf32, #tpu.memory_space<vmem>>, %arg7: memref<1x256xf32, #tpu.memory_space<vmem>>, %arg8: memref<256x512xf32, #tpu.memory_space<vmem>>, %arg9: memref<1x512xf32, #tpu.memory_space<vmem>>, %arg10: memref<8x512xf32, #tpu.memory_space<vmem>>, %arg11: memref<512x8xf32, #tpu.memory_space<vmem>>, %arg12: memref<512x128xf32, #tpu.memory_space<vmem>>, %arg13: memref<8x128xf32, #tpu.memory_space<vmem>>) attributes {dimension_semantics = [#tpu.dimension_semantics<parallel>], iteration_bounds = array<i64: 1>, scalar_prefetch = 0 : i64, scratch_operands = 0 : i64, tpu.core_type = #tpu.core_type<tc>, window_params = [{transform_indices = @transform_0, window_bounds = array<i64: 8, 128>}, {pipeline_mode = #tpu.pipeline_mode<synchronous>, transform_indices = @transform_1, window_bounds = array<i64: 128, 128>}, {pipeline_mode = #tpu.pipeline_mode<synchronous>, transform_indices = @transform_2, window_bounds = array<i64: 1, 128>}, {pipeline_mode = #tpu.pipeline_mode<synchronous>, transform_indices = @transform_3, window_bounds = array<i64: 128, 128>}, {pipeline_mode = #tpu.pipeline_mode<synchronous>, transform_indices = @transform_4, window_bounds = array<i64: 1, 128>}, {pipeline_mode = #tpu.pipeline_mode<synchronous>, transform_indices = @transform_5, window_bounds = array<i64: 128, 256>}, {pipeline_mode = #tpu.pipeline_mode<synchronous>, transform_indices = @transform_6, window_bounds = array<i64: 1, 256>}, {pipeline_mode = #tpu.pipeline_mode<synchronous>, transform_indices = @transform_7, window_bounds = array<i64: 256, 512>}, {pipeline_mode = #tpu.pipeline_mode<synchronous>, transform_indices = @transform_8, window_bounds = array<i64: 1, 512>}, {pipeline_mode = #tpu.pipeline_mode<synchronous>, transform_indices = @transform_9, window_bounds = array<i64: 8, 512>}, {pipeline_mode = #tpu.pipeline_mode<synchronous>, transform_indices = @transform_10, window_bounds = array<i64: 512, 8>}, {pipeline_mode = #tpu.pipeline_mode<synchronous>, transform_indices = @transform_11, window_bounds = array<i64: 512, 128>}, {transform_indices = @transform_12, window_bounds = array<i64: 8, 128>}]} {
    %c0 = arith.constant 0 : index
    %c0_0 = arith.constant 0 : index
    %0 = vector.load %arg1[%c0, %c0_0] : memref<8x128xf32, #tpu.memory_space<vmem>>, vector<8x128xf32>
    %c0_1 = arith.constant 0 : index
    %c0_2 = arith.constant 0 : index
    %1 = vector.load %arg2[%c0_1, %c0_2] : memref<128x128xf32, #tpu.memory_space<vmem>>, vector<128x128xf32>
    %cst = arith.constant dense<0.000000e+00> : vector<8x128xf32>
    %2 = tpu.matmul %0, %1, %cst {dimension_numbers = #tpu.dot_dimension_numbers<[1], [0], [0], [1], [0, 0, 1, 1], [], []>} : vector<8x128xf32>, vector<128x128xf32>, vector<8x128xf32> -> vector<8x128xf32>
    %c0_3 = arith.constant 0 : index
    %c0_4 = arith.constant 0 : index
    %3 = vector.load %arg3[%c0_3, %c0_4] : memref<1x128xf32, #tpu.memory_space<vmem>>, vector<1x128xf32>
    %4 = vector.broadcast %3 : vector<1x128xf32> to vector<8x128xf32>
    %5 = arith.addf %2, %4 : vector<8x128xf32>
    %cst_5 = arith.constant 0.000000e+00 : f32
    %6 = vector.broadcast %cst_5 : f32 to vector<8x128xf32>
    %7 = arith.maximumf %5, %6 : vector<8x128xf32>
    %c0_6 = arith.constant 0 : index
    %c0_7 = arith.constant 0 : index
    %8 = vector.load %arg4[%c0_6, %c0_7] : memref<128x128xf32, #tpu.memory_space<vmem>>, vector<128x128xf32>
    %cst_8 = arith.constant dense<0.000000e+00> : vector<8x128xf32>
    %9 = tpu.matmul %7, %8, %cst_8 {dimension_numbers = #tpu.dot_dimension_numbers<[1], [0], [0], [1], [0, 0, 1, 1], [], []>} : vector<8x128xf32>, vector<128x128xf32>, vector<8x128xf32> -> vector<8x128xf32>
    %c0_9 = arith.constant 0 : index
    %c0_10 = arith.constant 0 : index
    %10 = vector.load %arg5[%c0_9, %c0_10] : memref<1x128xf32, #tpu.memory_space<vmem>>, vector<1x128xf32>
    %11 = vector.broadcast %10 : vector<1x128xf32> to vector<8x128xf32>
    %12 = arith.addf %9, %11 : vector<8x128xf32>
    %cst_11 = arith.constant 0.000000e+00 : f32
    %13 = vector.broadcast %cst_11 : f32 to vector<8x128xf32>
    %14 = arith.maximumf %12, %13 : vector<8x128xf32>
    %c0_12 = arith.constant 0 : index
    %c0_13 = arith.constant 0 : index
    %15 = vector.load %arg6[%c0_12, %c0_13] : memref<128x256xf32, #tpu.memory_space<vmem>>, vector<128x256xf32>
    %cst_14 = arith.constant dense<0.000000e+00> : vector<8x256xf32>
    %16 = tpu.matmul %14, %15, %cst_14 {dimension_numbers = #tpu.dot_dimension_numbers<[1], [0], [0], [1], [0, 0, 1, 1], [], []>} : vector<8x128xf32>, vector<128x256xf32>, vector<8x256xf32> -> vector<8x256xf32>
    %c0_15 = arith.constant 0 : index
    %c0_16 = arith.constant 0 : index
    %17 = vector.load %arg7[%c0_15, %c0_16] : memref<1x256xf32, #tpu.memory_space<vmem>>, vector<1x256xf32>
    %18 = vector.broadcast %17 : vector<1x256xf32> to vector<8x256xf32>
    %19 = arith.addf %16, %18 : vector<8x256xf32>
    %cst_17 = arith.constant 0.000000e+00 : f32
    %20 = vector.broadcast %cst_17 : f32 to vector<8x256xf32>
    %21 = arith.maximumf %19, %20 : vector<8x256xf32>
    %c0_18 = arith.constant 0 : index
    %c0_19 = arith.constant 0 : index
    %22 = vector.load %arg8[%c0_18, %c0_19] : memref<256x512xf32, #tpu.memory_space<vmem>>, vector<256x512xf32>
    %cst_20 = arith.constant dense<0.000000e+00> : vector<8x512xf32>
    %23 = tpu.matmul %21, %22, %cst_20 {dimension_numbers = #tpu.dot_dimension_numbers<[1], [0], [0], [1], [0, 0, 1, 1], [], []>} : vector<8x256xf32>, vector<256x512xf32>, vector<8x512xf32> -> vector<8x512xf32>
    %c0_21 = arith.constant 0 : index
    %c0_22 = arith.constant 0 : index
    %24 = vector.load %arg9[%c0_21, %c0_22] : memref<1x512xf32, #tpu.memory_space<vmem>>, vector<1x512xf32>
    %25 = vector.broadcast %24 : vector<1x512xf32> to vector<8x512xf32>
    %26 = arith.addf %23, %25 : vector<8x512xf32>
    %27 = vector.extract_strided_slice %26 {offsets = [0, 0], sizes = [8, 128], strides = [1, 1]} : vector<8x512xf32> to vector<8x128xf32>
    %cst_23 = arith.constant dense<0xFF800000> : vector<8xf32>
    %28 = vector.multi_reduction <maximumf>, %27, %cst_23 [1] : vector<8x128xf32> to vector<8xf32>
    %29 = vector.shape_cast %28 : vector<8xf32> to vector<8x1xf32>
    %30 = vector.broadcast %29 : vector<8x1xf32> to vector<8x128xf32>
    %31 = arith.subf %27, %30 : vector<8x128xf32>
    %32 = math.exp %31 : vector<8x128xf32>
    %33 = vector.extract_strided_slice %26 {offsets = [0, 128], sizes = [8, 128], strides = [1, 1]} : vector<8x512xf32> to vector<8x128xf32>
    %cst_24 = arith.constant dense<0xFF800000> : vector<8xf32>
    %34 = vector.multi_reduction <maximumf>, %33, %cst_24 [1] : vector<8x128xf32> to vector<8xf32>
    %35 = vector.shape_cast %34 : vector<8xf32> to vector<8x1xf32>
    %36 = vector.broadcast %35 : vector<8x1xf32> to vector<8x128xf32>
    %37 = arith.subf %33, %36 : vector<8x128xf32>
    %38 = math.exp %37 : vector<8x128xf32>
    %39 = vector.extract_strided_slice %26 {offsets = [0, 256], sizes = [8, 128], strides = [1, 1]} : vector<8x512xf32> to vector<8x128xf32>
    %cst_25 = arith.constant dense<0xFF800000> : vector<8xf32>
    %40 = vector.multi_reduction <maximumf>, %39, %cst_25 [1] : vector<8x128xf32> to vector<8xf32>
    %41 = vector.shape_cast %40 : vector<8xf32> to vector<8x1xf32>
    %42 = vector.broadcast %41 : vector<8x1xf32> to vector<8x128xf32>
    %43 = arith.subf %39, %42 : vector<8x128xf32>
    %44 = math.exp %43 : vector<8x128xf32>
    %45 = vector.extract_strided_slice %26 {offsets = [0, 384], sizes = [8, 128], strides = [1, 1]} : vector<8x512xf32> to vector<8x128xf32>
    %cst_26 = arith.constant dense<0xFF800000> : vector<8xf32>
    %46 = vector.multi_reduction <maximumf>, %45, %cst_26 [1] : vector<8x128xf32> to vector<8xf32>
    %47 = vector.shape_cast %46 : vector<8xf32> to vector<8x1xf32>
    %48 = vector.broadcast %47 : vector<8x1xf32> to vector<8x128xf32>
    %49 = arith.subf %45, %48 : vector<8x128xf32>
    %50 = math.exp %49 : vector<8x128xf32>
    %51 = tpu.concatenate %32, %38, %44, %50 in 1 : vector<8x128xf32>, vector<8x128xf32>, vector<8x128xf32>, vector<8x128xf32> -> vector<8x512xf32>
    %c0_27 = arith.constant 0 : index
    %c0_28 = arith.constant 0 : index
    %52 = vector.load %arg11[%c0_27, %c0_28] : memref<512x8xf32, #tpu.memory_space<vmem>>, vector<512x8xf32>
    %cst_29 = arith.constant dense<0.000000e+00> : vector<8x8xf32>
    %53 = tpu.matmul %51, %52, %cst_29 {dimension_numbers = #tpu.dot_dimension_numbers<[1], [0], [0], [1], [0, 0, 1, 1], [], []>} : vector<8x512xf32>, vector<512x8xf32>, vector<8x8xf32> -> vector<8x8xf32>
    %54 = tpu.reciprocal %53 {approx = true} : vector<8x8xf32> -> vector<8x8xf32>
    %c0_30 = arith.constant 0 : index
    %c0_31 = arith.constant 0 : index
    %55 = vector.load %arg10[%c0_30, %c0_31] : memref<8x512xf32, #tpu.memory_space<vmem>>, vector<8x512xf32>
    %cst_32 = arith.constant dense<0.000000e+00> : vector<8x512xf32>
    %56 = tpu.matmul %54, %55, %cst_32 {dimension_numbers = #tpu.dot_dimension_numbers<[1], [0], [0], [1], [0, 0, 1, 1], [], []>} : vector<8x8xf32>, vector<8x512xf32>, vector<8x512xf32> -> vector<8x512xf32>
    %57 = arith.mulf %51, %56 : vector<8x512xf32>
    %cst_33 = arith.constant 1.000000e-03 : f32
    %58 = vector.broadcast %cst_33 : f32 to vector<8x512xf32>
    %59 = arith.maximumf %57, %58 : vector<8x512xf32>
    %c0_34 = arith.constant 0 : index
    %c0_35 = arith.constant 0 : index
    %60 = vector.load %arg12[%c0_34, %c0_35] : memref<512x128xf32, #tpu.memory_space<vmem>>, vector<512x128xf32>
    %cst_36 = arith.constant dense<0.000000e+00> : vector<8x128xf32>
    %61 = tpu.matmul %59, %60, %cst_36 {dimension_numbers = #tpu.dot_dimension_numbers<[1], [0], [0], [1], [0, 0, 1, 1], [], []>} : vector<8x512xf32>, vector<512x128xf32>, vector<8x128xf32> -> vector<8x128xf32>
    %c0_37 = arith.constant 0 : index
    %c0_38 = arith.constant 0 : index
    %62 = vector.load %arg13[%c0_37, %c0_38] : memref<8x128xf32, #tpu.memory_space<vmem>>, vector<8x128xf32>
    tpu.vector_store %arg13[%c0_37, %c0_38], %61 {strides = array<i32>} : memref<8x128xf32, #tpu.memory_space<vmem>>, vector<8x128xf32>,
    return
  }
  func.func @transform_0(%arg0: i32) -> (i32, i32) {
    %c0_i32 = arith.constant 0 : i32
    %c0_i32_0 = arith.constant 0 : i32
    return %arg0, %c0_i32 : i32, i32
  }
  func.func @transform_1(%arg0: i32) -> (i32, i32) {
    %c0_i32 = arith.constant 0 : i32
    %c0_i32_0 = arith.constant 0 : i32
    %c0_i32_1 = arith.constant 0 : i32
    return %c0_i32, %c0_i32_0 : i32, i32
  }
  func.func @transform_2(%arg0: i32) -> (i32, i32) {
    %c0_i32 = arith.constant 0 : i32
    %c0_i32_0 = arith.constant 0 : i32
    %c0_i32_1 = arith.constant 0 : i32
    return %c0_i32, %c0_i32_0 : i32, i32
  }
  func.func @transform_3(%arg0: i32) -> (i32, i32) {
    %c0_i32 = arith.constant 0 : i32
    %c0_i32_0 = arith.constant 0 : i32
    %c0_i32_1 = arith.constant 0 : i32
    return %c0_i32, %c0_i32_0 : i32, i32
  }
  func.func @transform_4(%arg0: i32) -> (i32, i32) {
    %c0_i32 = arith.constant 0 : i32
    %c0_i32_0 = arith.constant 0 : i32
    %c0_i32_1 = arith.constant 0 : i32
    return %c0_i32, %c0_i32_0 : i32, i32
  }
  func.func @transform_5(%arg0: i32) -> (i32, i32) {
    %c0_i32 = arith.constant 0 : i32
    %c0_i32_0 = arith.constant 0 : i32
    %c0_i32_1 = arith.constant 0 : i32
    return %c0_i32, %c0_i32_0 : i32, i32
  }
  func.func @transform_6(%arg0: i32) -> (i32, i32) {
    %c0_i32 = arith.constant 0 : i32
    %c0_i32_0 = arith.constant 0 : i32
    %c0_i32_1 = arith.constant 0 : i32
    return %c0_i32, %c0_i32_0 : i32, i32
  }
  func.func @transform_7(%arg0: i32) -> (i32, i32) {
    %c0_i32 = arith.constant 0 : i32
    %c0_i32_0 = arith.constant 0 : i32
    %c0_i32_1 = arith.constant 0 : i32
    return %c0_i32, %c0_i32_0 : i32, i32
  }
  func.func @transform_8(%arg0: i32) -> (i32, i32) {
    %c0_i32 = arith.constant 0 : i32
    %c0_i32_0 = arith.constant 0 : i32
    %c0_i32_1 = arith.constant 0 : i32
    return %c0_i32, %c0_i32_0 : i32, i32
  }
  func.func @transform_9(%arg0: i32) -> (i32, i32) {
    %c0_i32 = arith.constant 0 : i32
    %c0_i32_0 = arith.constant 0 : i32
    %c0_i32_1 = arith.constant 0 : i32
    return %c0_i32, %c0_i32_0 : i32, i32
  }
  func.func @transform_10(%arg0: i32) -> (i32, i32) {
    %c0_i32 = arith.constant 0 : i32
    %c0_i32_0 = arith.constant 0 : i32
    %c0_i32_1 = arith.constant 0 : i32
    return %c0_i32, %c0_i32_0 : i32, i32
  }
  func.func @transform_11(%arg0: i32) -> (i32, i32) {
    %c0_i32 = arith.constant 0 : i32
    %c0_i32_0 = arith.constant 0 : i32
    %c0_i32_1 = arith.constant 0 : i32
    return %c0_i32, %c0_i32_0 : i32, i32
  }
  func.func @transform_12(%arg0: i32) -> (i32, i32) {
    %c0_i32 = arith.constant 0 : i32
    %c0_i32_0 = arith.constant 0 : i32
    return %arg0, %c0_i32 : i32, i32
  }
}

</mosaic_0001>

<llo_original>
// kernel: rainbow_forward.1
$region0: #{rainbow_forward.1}
  #allocation0 [shape = 'u32[]', space=smem, size = 0x4, offset = 0x4, fixed_abs, tag = 'smem constant byte address 0x4 - core index']
  #allocation1 [shape = 'u32[144,128]{1,0:T(1,128)}', space=vmem, size = 0x12000, scoped, tag = 'internal scratch']
  %s0 = inlined_call_operand.vmem [shape: f32[8,128], index: 0, kind: input, shape index: {}]
  %s1 = inlined_call_operand.hbm [shape: f32[128,128], index: 1, kind: input, shape index: {}]
  %s2 = inlined_call_operand.vmem [shape: f32[1,128], index: 2, kind: input, shape index: {}]
  %s3 = inlined_call_operand.hbm [shape: f32[128,128], index: 3, kind: input, shape index: {}]
  %s4 = inlined_call_operand.vmem [shape: f32[1,128], index: 4, kind: input, shape index: {}]
  %s5 = inlined_call_operand.hbm [shape: f32[128,256], index: 5, kind: input, shape index: {}]
  %s6 = inlined_call_operand.vmem [shape: f32[1,256], index: 6, kind: input, shape index: {}]
  %s7 = inlined_call_operand.hbm [shape: f32[256,512], index: 7, kind: input, shape index: {}]
  %s8 = inlined_call_operand.vmem [shape: f32[1,512], index: 8, kind: input, shape index: {}]
  %s9 = inlined_call_operand.vmem [shape: f32[8,512], index: 9, kind: input, shape index: {}]
  %s10 = inlined_call_operand.vmem [shape: f32[512,8], index: 10, kind: input, shape index: {}]
  %s11 = inlined_call_operand.vmem [shape: f32[512,128], index: 11, kind: input, shape index: {}]
  %s12 = inlined_call_operand.vmem [shape: f32[8,128], index: 12, kind: output, shape index: {}]
  %s13 = sld [smem:[#allocation0]]
  $region74: #{rainbow_forward.1} parent=0
    _
  %s15 = ssub.s32 1, %s13
  %s16 = scalar_select 0, %s15, %s13
  $region1: #{rainbow_forward.1} parent=0
    #allocation2 [shape = 'u8[65536]{0}', space=vmem, size = 0x10000, scoped, tag = 'input window, operand 1, single buffered']
    #allocation3 [shape = 's32[1]{0}', space=sflag, size = 0x4, scoped, tag = 'scoped memory for rainbow_forward.1']
    #allocation4 [shape = 'u8[65536]{0}', space=vmem, size = 0x10000, scoped, tag = 'input window, operand 3, single buffered']
    #allocation5 [shape = 's32[1]{0}', space=sflag, size = 0x4, scoped, tag = 'scoped memory for rainbow_forward.1']
    #allocation6 [shape = 'u8[131072]{0}', space=vmem, size = 0x20000, scoped, tag = 'input window, operand 5, single buffered']
    #allocation7 [shape = 'u8[524288]{0}', space=vmem, size = 0x80000, scoped, tag = 'input window, operand 7, single buffered']
    #allocation8 [shape = 's32[1]{0}', space=sflag, size = 0x4, scoped, tag = 'scoped memory for rainbow_forward.1']
    %17 = vsyncpa [#allocation3], 0
    %18 = vsyncpa [#allocation5], 0
    %19 = vsyncpa [#allocation8], 0
    // Predicated region
    $region2: #{rainbow_forward.1} parent=1 // pred_check
      _
    $region3: #{rainbow_forward.1} parent=1 // pred_check_branch
      %21 = sbr.rel (0) target = $region5
    $region4: #{rainbow_forward.1} parent=1 // pred_region
      _
    $region5: #{rainbow_forward.1} parent=1 // pred_fallthru
      _
    // Predicated region
    $region6: #{rainbow_forward.1} parent=1 // pred_check
      _
    $region7: #{rainbow_forward.1} parent=1 // pred_check_branch
      %23 = sbr.rel (0) target = $region9
    $region8: #{rainbow_forward.1} parent=1 // pred_region
      %s25 = ssub.s32 2048, 2048
      %26 = vsyncadd [#allocation3], %s25
      %s27 = sshll.u32 [#allocation2], 4
      %s28 = int_to_ptr.vmem [resolvable:$true] %s27
      %33 = dma.hbm_to_vmem [thread:$0]  %s1, 2048, %s28, [#allocation3], 128, 128, 8
    $region9: #{rainbow_forward.1} parent=1 // pred_fallthru
      _
    // Predicated region
    $region10: #{rainbow_forward.1} parent=1 // pred_check
      _
    $region11: #{rainbow_forward.1} parent=1 // pred_check_branch
      %35 = sbr.rel (0) target = $region13
    $region12: #{rainbow_forward.1} parent=1 // pred_region
      _
    $region13: #{rainbow_forward.1} parent=1 // pred_fallthru
      _
    // Predicated region
    $region14: #{rainbow_forward.1} parent=1 // pred_check
      _
    $region15: #{rainbow_forward.1} parent=1 // pred_check_branch
      %37 = sbr.rel (0) target = $region17
    $region16: #{rainbow_forward.1} parent=1 // pred_region
      %s39 = ssub.s32 2048, 2048
      %40 = vsyncadd [#allocation5], %s39
      %s41 = sshll.u32 [#allocation4], 4
      %s42 = int_to_ptr.vmem [resolvable:$true] %s41
      %47 = dma.hbm_to_vmem [thread:$0]  %s3, 2048, %s42, [#allocation5], 128, 128, 8
    $region17: #{rainbow_forward.1} parent=1 // pred_fallthru
      _
    // Predicated region
    $region18: #{rainbow_forward.1} parent=1 // pred_check
      _
    $region19: #{rainbow_forward.1} parent=1 // pred_check_branch
      %49 = sbr.rel (0) target = $region21
    $region20: #{rainbow_forward.1} parent=1 // pred_region
      _
    $region21: #{rainbow_forward.1} parent=1 // pred_fallthru
      _
    // Predicated region
    $region22: #{rainbow_forward.1} parent=1 // pred_check
      _
    $region23: #{rainbow_forward.1} parent=1 // pred_check_branch
      %51 = sbr.rel (0) target = $region25
    $region24: #{rainbow_forward.1} parent=1 // pred_region
      %s53 = ssub.s32 4096, 4096
      %54 = vsyncadd [#allocation5], %s53
      %s55 = sshll.u32 [#allocation6], 4
      %s56 = int_to_ptr.vmem [resolvable:$true] %s55
      %61 = dma.hbm_to_vmem [thread:$0]  %s5, 4096, %s56, [#allocation5], 256, 256, 16
    $region25: #{rainbow_forward.1} parent=1 // pred_fallthru
      _
    // Predicated region
    $region26: #{rainbow_forward.1} parent=1 // pred_check
      _
    $region27: #{rainbow_forward.1} parent=1 // pred_check_branch
      %63 = sbr.rel (0) target = $region29
    $region28: #{rainbow_forward.1} parent=1 // pred_region
      _
    $region29: #{rainbow_forward.1} parent=1 // pred_fallthru
      _
    // Predicated region
    $region30: #{rainbow_forward.1} parent=1 // pred_check
      _
    $region31: #{rainbow_forward.1} parent=1 // pred_check_branch
      %65 = sbr.rel (0) target = $region33
    $region32: #{rainbow_forward.1} parent=1 // pred_region
      %s67 = ssub.s32 16384, 16384
      %68 = vsyncadd [#allocation8], %s67
      %s69 = sshll.u32 [#allocation7], 4
      %s70 = int_to_ptr.vmem [resolvable:$true] %s69
      %75 = dma.hbm_to_vmem [thread:$0]  %s7, 16384, %s70, [#allocation8], 512, 512, 32
    $region33: #{rainbow_forward.1} parent=1 // pred_fallthru
      _
    // Predicated region
    $region34: #{rainbow_forward.1} parent=1 // pred_check
      _
    $region35: #{rainbow_forward.1} parent=1 // pred_check_branch
      %77 = sbr.rel (0) target = $region37
    $region36: #{rainbow_forward.1} parent=1 // pred_region
      _
    $region37: #{rainbow_forward.1} parent=1 // pred_fallthru
      _
    // Predicated region
    $region38: #{rainbow_forward.1} parent=1 // pred_check
      _
    $region39: #{rainbow_forward.1} parent=1 // pred_check_branch
      %79 = sbr.rel (0) target = $region41
    $region40: #{rainbow_forward.1} parent=1 // pred_region
      _
    $region41: #{rainbow_forward.1} parent=1 // pred_fallthru
      _
    // Predicated region
    $region42: #{rainbow_forward.1} parent=1 // pred_check
      _
    $region43: #{rainbow_forward.1} parent=1 // pred_check_branch
      %81 = sbr.rel (0) target = $region45
    $region44: #{rainbow_forward.1} parent=1 // pred_region
      _
    $region45: #{rainbow_forward.1} parent=1 // pred_fallthru
      _
    // Predicated region
    $region46: #{rainbow_forward.1} parent=1 // pred_check
      _
    $region47: #{rainbow_forward.1} parent=1 // pred_check_branch
      %83 = sbr.rel (0) target = $region49
    $region48: #{rainbow_forward.1} parent=1 // pred_region
      _
    $region49: #{rainbow_forward.1} parent=1 // pred_fallthru
      _
    // Predicated region
    $region50: #{rainbow_forward.1} parent=1 // pred_check
      _
    $region51: #{rainbow_forward.1} parent=1 // pred_check_branch
      %85 = sbr.rel (0) target = $region53
    $region52: #{rainbow_forward.1} parent=1 // pred_region
      %86 = dma.done [#allocation3], 2048
    $region53: #{rainbow_forward.1} parent=1 // pred_fallthru
      _
    // Predicated region
    $region54: #{rainbow_forward.1} parent=1 // pred_check
      _
    $region55: #{rainbow_forward.1} parent=1 // pred_check_branch
      %88 = sbr.rel (0) target = $region57
    $region56: #{rainbow_forward.1} parent=1 // pred_region
      %89 = dma.done [#allocation5], 2048
    $region57: #{rainbow_forward.1} parent=1 // pred_fallthru
      _
    // Predicated region
    $region58: #{rainbow_forward.1} parent=1 // pred_check
      _
    $region59: #{rainbow_forward.1} parent=1 // pred_check_branch
      %91 = sbr.rel (0) target = $region61
    $region60: #{rainbow_forward.1} parent=1 // pred_region
      %92 = dma.done [#allocation5], 4096
    $region61: #{rainbow_forward.1} parent=1 // pred_fallthru
      _
    // Predicated region
    $region62: #{rainbow_forward.1} parent=1 // pred_check
      _
    $region63: #{rainbow_forward.1} parent=1 // pred_check_branch
      %94 = sbr.rel (0) target = $region65
    $region64: #{rainbow_forward.1} parent=1 // pred_region
      %95 = dma.done [#allocation8], 16384
    $region65: #{rainbow_forward.1} parent=1 // pred_fallthru
      _
    %v96 = vld [vmem:[%s0] sm:$0xff]
    %v97 = vld [vmem:[#allocation2] sm:$0xff]
    %v98 = vld [vmem:[#allocation2 + $0x8] sm:$0xff]
    %v99 = vld [vmem:[#allocation2 + $0x10] sm:$0xff]
    %v100 = vld [vmem:[#allocation2 + $0x18] sm:$0xff]
    %v101 = vld [vmem:[#allocation2 + $0x20] sm:$0xff]
    %v102 = vld [vmem:[#allocation2 + $0x28] sm:$0xff]
    %v103 = vld [vmem:[#allocation2 + $0x30] sm:$0xff]
    %v104 = vld [vmem:[#allocation2 + $0x38] sm:$0xff]
    %v105 = vld [vmem:[#allocation2 + $0x40] sm:$0xff]
    %v106 = vld [vmem:[#allocation2 + $0x48] sm:$0xff]
    %v107 = vld [vmem:[#allocation2 + $0x50] sm:$0xff]
    %v108 = vld [vmem:[#allocation2 + $0x58] sm:$0xff]
    %v109 = vld [vmem:[#allocation2 + $0x60] sm:$0xff]
    %v110 = vld [vmem:[#allocation2 + $0x68] sm:$0xff]
    %v111 = vld [vmem:[#allocation2 + $0x70] sm:$0xff]
    %v112 = vld [vmem:[#allocation2 + $0x78] sm:$0xff]
    %v113 = vld [vmem:[%s2] sm:$0x1]
    %v115 = vlaneseq
    %v116 = vshrl.u32 %v115, 7
    %v117 = vsub.s32 0, %v116
    %v118 = vrot.slane %v113, %v117
    %120 = vmatprep.subr.mxu0 0.0
    %121 = vmatpush1.msra.mxu0 %v97
    %122 = vmatprep.subr.mxu0 0.0
    %123 = vmatpush1.msra.mxu0 %v98
    %124 = vmatprep.subr.mxu0 0.0
    %125 = vmatpush1.msra.mxu0 %v99
    %126 = vmatprep.subr.mxu0 0.0
    %127 = vmatpush1.msra.mxu0 %v100
    %128 = vmatprep.subr.mxu0 0.0
    %129 = vmatpush1.msra.mxu0 %v101
    %130 = vmatprep.subr.mxu0 0.0
    %131 = vmatpush1.msra.mxu0 %v102
    %132 = vmatprep.subr.mxu0 0.0
    %133 = vmatpush1.msra.mxu0 %v103
    %134 = vmatprep.subr.mxu0 0.0
    %135 = vmatpush1.msra.mxu0 %v104
    %136 = vmatprep.subr.mxu0 0.0
    %137 = vmatpush1.msra.mxu0 %v105
    %138 = vmatprep.subr.mxu0 0.0
    %139 = vmatpush1.msra.mxu0 %v106
    %140 = vmatprep.subr.mxu0 0.0
    %141 = vmatpush1.msra.mxu0 %v107
    %142 = vmatprep.subr.mxu0 0.0
    %143 = vmatpush1.msra.mxu0 %v108
    %144 = vmatprep.subr.mxu0 0.0
    %145 = vmatpush1.msra.mxu0 %v109
    %146 = vmatprep.subr.mxu0 0.0
    %147 = vmatpush1.msra.mxu0 %v110
    %148 = vmatprep.subr.mxu0 0.0
    %149 = vmatpush1.msra.mxu0 %v111
    %150 = vmatprep.subr.mxu0 0.0
    %151 = vmatpush1.msra.mxu0 %v112
    %152 = vmatprep.subr.mxu0 0.0
    %153 = vmatpush1.msra.mxu0 0.0
    %154 = vmatprep.subr.mxu0 0.0
    %155 = vmatpush1.msra.mxu0 0.0
    %156 = vmatprep.subr.mxu0 0.0
    %157 = vmatpush1.msra.mxu0 0.0
    %158 = vmatprep.subr.mxu0 0.0
    %159 = vmatpush1.msra.mxu0 0.0
    %160 = vmatprep.subr.mxu0 0.0
    %161 = vmatpush1.msra.mxu0 0.0
    %162 = vmatprep.subr.mxu0 0.0
    %163 = vmatpush1.msra.mxu0 0.0
    %164 = vmatprep.subr.mxu0 0.0
    %165 = vmatpush1.msra.mxu0 0.0
    %166 = vmatprep.subr.mxu0 0.0
    %167 = vmatpush1.msra.mxu0 0.0
    %168 = vmatprep.subr.mxu0 0.0
    %169 = vmatpush1.msra.mxu0 0.0
    %170 = vmatprep.subr.mxu0 0.0
    %171 = vmatpush1.msra.mxu0 0.0
    %172 = vmatprep.subr.mxu0 0.0
    %173 = vmatpush1.msra.mxu0 0.0
    %174 = vmatprep.subr.mxu0 0.0
    %175 = vmatpush1.msra.mxu0 0.0
    %176 = vmatprep.subr.mxu0 0.0
    %177 = vmatpush1.msra.mxu0 0.0
    %178 = vmatprep.subr.mxu0 0.0
    %179 = vmatpush1.msra.mxu0 0.0
    %180 = vmatprep.subr.mxu0 0.0
    %181 = vmatpush1.msra.mxu0 0.0
    %182 = vmatprep.subr.mxu0 0.0
    %183 = vmatpush1.msra.mxu0 0.0
    %184 = vmatprep.mubr.f32.mxu0 0.0
    %185 = vmatmul.mubr.f32.gmra.mrb[0].mxu0 %v96
    %v186 = vpop.f32.mrb[0].mxu0
    %v187 = vadd.f32 %v118, %v186
    %v188 = vpop.f32.mrb[0].mxu0
    %189 = vdwg.mxu0
    %v190 = vmax.f32 %v187, 0.0
    %v191 = vld [vmem:[#allocation4] sm:$0xff]
    %v192 = vld [vmem:[#allocation4 + $0x8] sm:$0xff]
    %v193 = vld [vmem:[#allocation4 + $0x10] sm:$0xff]
    %v194 = vld [vmem:[#allocation4 + $0x18] sm:$0xff]
    %v195 = vld [vmem:[#allocation4 + $0x20] sm:$0xff]
    %v196 = vld [vmem:[#allocation4 + $0x28] sm:$0xff]
    %v197 = vld [vmem:[#allocation4 + $0x30] sm:$0xff]
    %v198 = vld [vmem:[#allocation4 + $0x38] sm:$0xff]
    %v199 = vld [vmem:[#allocation4 + $0x40] sm:$0xff]
    %v200 = vld [vmem:[#allocation4 + $0x48] sm:$0xff]
    %v201 = vld [vmem:[#allocation4 + $0x50] sm:$0xff]
    %v202 = vld [vmem:[#allocation4 + $0x58] sm:$0xff]
    %v203 = vld [vmem:[#allocation4 + $0x60] sm:$0xff]
    %v204 = vld [vmem:[#allocation4 + $0x68] sm:$0xff]
    %v205 = vld [vmem:[#allocation4 + $0x70] sm:$0xff]
    %v206 = vld [vmem:[#allocation4 + $0x78] sm:$0xff]
    %v207 = vld [vmem:[%s4] sm:$0x1]
    %v209 = vlaneseq
    %v210 = vshrl.u32 %v209, 7
    %v211 = vsub.s32 0, %v210
    %v212 = vrot.slane %v207, %v211
    %214 = vmatprep.subr.mxu0 0.0
    %215 = vmatpush1.msra.mxu0 %v191
    %216 = vmatprep.subr.mxu0 0.0
    %217 = vmatpush1.msra.mxu0 %v192
    %218 = vmatprep.subr.mxu0 0.0
    %219 = vmatpush1.msra.mxu0 %v193
    %220 = vmatprep.subr.mxu0 0.0
    %221 = vmatpush1.msra.mxu0 %v194
    %222 = vmatprep.subr.mxu0 0.0
    %223 = vmatpush1.msra.mxu0 %v195
    %224 = vmatprep.subr.mxu0 0.0
    %225 = vmatpush1.msra.mxu0 %v196
    %226 = vmatprep.subr.mxu0 0.0
    %227 = vmatpush1.msra.mxu0 %v197
    %228 = vmatprep.subr.mxu0 0.0
    %229 = vmatpush1.msra.mxu0 %v198
    %230 = vmatprep.subr.mxu0 0.0
    %231 = vmatpush1.msra.mxu0 %v199
    %232 = vmatprep.subr.mxu0 0.0
    %233 = vmatpush1.msra.mxu0 %v200
    %234 = vmatprep.subr.mxu0 0.0
    %235 = vmatpush1.msra.mxu0 %v201
    %236 = vmatprep.subr.mxu0 0.0
    %237 = vmatpush1.msra.mxu0 %v202
    %238 = vmatprep.subr.mxu0 0.0
    %239 = vmatpush1.msra.mxu0 %v203
    %240 = vmatprep.subr.mxu0 0.0
    %241 = vmatpush1.msra.mxu0 %v204
    %242 = vmatprep.subr.mxu0 0.0
    %243 = vmatpush1.msra.mxu0 %v205
    %244 = vmatprep.subr.mxu0 0.0
    %245 = vmatpush1.msra.mxu0 %v206
    %246 = vmatprep.subr.mxu0 0.0
    %247 = vmatpush1.msra.mxu0 0.0
    %248 = vmatprep.subr.mxu0 0.0
    %249 = vmatpush1.msra.mxu0 0.0
    %250 = vmatprep.subr.mxu0 0.0
    %251 = vmatpush1.msra.mxu0 0.0
    %252 = vmatprep.subr.mxu0 0.0
    %253 = vmatpush1.msra.mxu0 0.0
    %254 = vmatprep.subr.mxu0 0.0
    %255 = vmatpush1.msra.mxu0 0.0
    %256 = vmatprep.subr.mxu0 0.0
    %257 = vmatpush1.msra.mxu0 0.0
    %258 = vmatprep.subr.mxu0 0.0
    %259 = vmatpush1.msra.mxu0 0.0
    %260 = vmatprep.subr.mxu0 0.0
    %261 = vmatpush1.msra.mxu0 0.0
    %262 = vmatprep.subr.mxu0 0.0
    %263 = vmatpush1.msra.mxu0 0.0
    %264 = vmatprep.subr.mxu0 0.0
    %265 = vmatpush1.msra.mxu0 0.0
    %266 = vmatprep.subr.mxu0 0.0
    %267 = vmatpush1.msra.mxu0 0.0
    %268 = vmatprep.subr.mxu0 0.0
    %269 = vmatpush1.msra.mxu0 0.0
    %270 = vmatprep.subr.mxu0 0.0
    %271 = vmatpush1.msra.mxu0 0.0
    %272 = vmatprep.subr.mxu0 0.0
    %273 = vmatpush1.msra.mxu0 0.0
    %274 = vmatprep.subr.mxu0 0.0
    %275 = vmatpush1.msra.mxu0 0.0
    %276 = vmatprep.subr.mxu0 0.0
    %277 = vmatpush1.msra.mxu0 0.0
    %278 = vmatprep.mubr.f32.mxu0 0.0
    %279 = vmatmul.mubr.f32.gmra.mrb[0].mxu0 %v190
    %v280 = vpop.f32.mrb[0].mxu0
    %v281 = vadd.f32 %v212, %v280
    %v282 = vpop.f32.mrb[0].mxu0
    %283 = vdwg.mxu0
    %v284 = vmax.f32 %v281, 0.0
    %v285 = vld [vmem:[#allocation6] sm:$0xff]
    %v286 = vld [vmem:[#allocation6 + $0x8] sm:$0xff]
    %v287 = vld [vmem:[#allocation6 + $0x10] sm:$0xff]
    %v288 = vld [vmem:[#allocation6 + $0x18] sm:$0xff]
    %v289 = vld [vmem:[#allocation6 + $0x20] sm:$0xff]
    %v290 = vld [vmem:[#allocation6 + $0x28] sm:$0xff]
    %v291 = vld [vmem:[#allocation6 + $0x30] sm:$0xff]
    %v292 = vld [vmem:[#allocation6 + $0x38] sm:$0xff]
    %v293 = vld [vmem:[#allocation6 + $0x40] sm:$0xff]
    %v294 = vld [vmem:[#allocation6 + $0x48] sm:$0xff]
    %v295 = vld [vmem:[#allocation6 + $0x50] sm:$0xff]
    %v296 = vld [vmem:[#allocation6 + $0x58] sm:$0xff]
    %v297 = vld [vmem:[#allocation6 + $0x60] sm:$0xff]
    %v298 = vld [vmem:[#allocation6 + $0x68] sm:$0xff]
    %v299 = vld [vmem:[#allocation6 + $0x70] sm:$0xff]
    %v300 = vld [vmem:[#allocation6 + $0x78] sm:$0xff]
    %v301 = vld [vmem:[#allocation6 + $0x80] sm:$0xff]
    %v302 = vld [vmem:[#allocation6 + $0x88] sm:$0xff]
    %v303 = vld [vmem:[#allocation6 + $0x90] sm:$0xff]
    %v304 = vld [vmem:[#allocation6 + $0x98] sm:$0xff]
    %v305 = vld [vmem:[#allocation6 + $0xa0] sm:$0xff]
    %v306 = vld [vmem:[#allocation6 + $0xa8] sm:$0xff]
    %v307 = vld [vmem:[#allocation6 + $0xb0] sm:$0xff]
    %v308 = vld [vmem:[#allocation6 + $0xb8] sm:$0xff]
    %v309 = vld [vmem:[#allocation6 + $0xc0] sm:$0xff]
    %v310 = vld [vmem:[#allocation6 + $0xc8] sm:$0xff]
    %v311 = vld [vmem:[#allocation6 + $0xd0] sm:$0xff]
    %v312 = vld [vmem:[#allocation6 + $0xd8] sm:$0xff]
    %v313 = vld [vmem:[#allocation6 + $0xe0] sm:$0xff]
    %v314 = vld [vmem:[#allocation6 + $0xe8] sm:$0xff]
    %v315 = vld [vmem:[#allocation6 + $0xf0] sm:$0xff]
    %v316 = vld [vmem:[#allocation6 + $0xf8] sm:$0xff]
    %v317 = vld [vmem:[%s6] sm:$0x3]
    %v319 = vlaneseq
    %v320 = vshrl.u32 %v319, 7
    %v321 = vsub.s32 0, %v320
    %v322 = vrot.slane %v317, %v321
    %v323 = vlaneseq
    %v324 = vshrl.u32 %v323, 7
    %v325 = vsub.s32 1, %v324
    %v326 = vrot.slane %v317, %v325
    %329 = vmatprep.subr.mxu0 %v286
    %330 = vmatpush1.msra.mxu0 %v285
    %331 = vmatprep.subr.mxu0 %v288
    %332 = vmatpush1.msra.mxu0 %v287
    %333 = vmatprep.subr.mxu0 %v290
    %334 = vmatpush1.msra.mxu0 %v289
    %335 = vmatprep.subr.mxu0 %v292
    %336 = vmatpush1.msra.mxu0 %v291
    %337 = vmatprep.subr.mxu0 %v294
    %338 = vmatpush1.msra.mxu0 %v293
    %339 = vmatprep.subr.mxu0 %v296
    %340 = vmatpush1.msra.mxu0 %v295
    %341 = vmatprep.subr.mxu0 %v298
    %342 = vmatpush1.msra.mxu0 %v297
    %343 = vmatprep.subr.mxu0 %v300
    %344 = vmatpush1.msra.mxu0 %v299
    %345 = vmatprep.subr.mxu0 %v302
    %346 = vmatpush1.msra.mxu0 %v301
    %347 = vmatprep.subr.mxu0 %v304
    %348 = vmatpush1.msra.mxu0 %v303
    %349 = vmatprep.subr.mxu0 %v306
    %350 = vmatpush1.msra.mxu0 %v305
    %351 = vmatprep.subr.mxu0 %v308
    %352 = vmatpush1.msra.mxu0 %v307
    %353 = vmatprep.subr.mxu0 %v310
    %354 = vmatpush1.msra.mxu0 %v309
    %355 = vmatprep.subr.mxu0 %v312
    %356 = vmatpush1.msra.mxu0 %v311
    %357 = vmatprep.subr.mxu0 %v314
    %358 = vmatpush1.msra.mxu0 %v313
    %359 = vmatprep.subr.mxu0 %v316
    %360 = vmatpush1.msra.mxu0 %v315
    %361 = vmatprep.subr.mxu0 0.0
    %362 = vmatpush1.msra.mxu0 0.0
    %363 = vmatprep.subr.mxu0 0.0
    %364 = vmatpush1.msra.mxu0 0.0
    %365 = vmatprep.subr.mxu0 0.0
    %366 = vmatpush1.msra.mxu0 0.0
    %367 = vmatprep.subr.mxu0 0.0
    %368 = vmatpush1.msra.mxu0 0.0
    %369 = vmatprep.subr.mxu0 0.0
    %370 = vmatpush1.msra.mxu0 0.0
    %371 = vmatprep.subr.mxu0 0.0
    %372 = vmatpush1.msra.mxu0 0.0
    %373 = vmatprep.subr.mxu0 0.0
    %374 = vmatpush1.msra.mxu0 0.0
    %375 = vmatprep.subr.mxu0 0.0
    %376 = vmatpush1.msra.mxu0 0.0
    %377 = vmatprep.subr.mxu0 0.0
    %378 = vmatpush1.msra.mxu0 0.0
    %379 = vmatprep.subr.mxu0 0.0
    %380 = vmatpush1.msra.mxu0 0.0
    %381 = vmatprep.subr.mxu0 0.0
    %382 = vmatpush1.msra.mxu0 0.0
    %383 = vmatprep.subr.mxu0 0.0
    %384 = vmatpush1.msra.mxu0 0.0
    %385 = vmatprep.subr.mxu0 0.0
    %386 = vmatpush1.msra.mxu0 0.0
    %387 = vmatprep.subr.mxu0 0.0
    %388 = vmatpush1.msra.mxu0 0.0
    %389 = vmatprep.subr.mxu0 0.0
    %390 = vmatpush1.msra.mxu0 0.0
    %391 = vmatprep.subr.mxu0 0.0
    %392 = vmatpush1.msra.mxu0 0.0
    %393 = vmatprep.mubr.f32.mxu0 0.0
    %394 = vmatmul.mubr.f32.gmra.mrb[0].mxu0 %v284
    %v395 = vpop.f32.mrb[0].mxu0
    %v396 = vadd.f32 %v322, %v395
    %v397 = vpop.f32.mrb[0].mxu0
    %v398 = vadd.f32 %v326, %v397
    %399 = vdwg.mxu0
    %v400 = vmax.f32 %v396, 0.0
    %v401 = vmax.f32 %v398, 0.0
    %v402 = vld [vmem:[#allocation7] sm:$0xff]
    %v403 = vld [vmem:[#allocation7 + $0x8] sm:$0xff]
    %v404 = vld [vmem:[#allocation7 + $0x10] sm:$0xff]
    %v405 = vld [vmem:[#allocation7 + $0x18] sm:$0xff]
    %v406 = vld [vmem:[#allocation7 + $0x20] sm:$0xff]
    %v407 = vld [vmem:[#allocation7 + $0x28] sm:$0xff]
    %v408 = vld [vmem:[#allocation7 + $0x30] sm:$0xff]
    %v409 = vld [vmem:[#allocation7 + $0x38] sm:$0xff]
    %v410 = vld [vmem:[#allocation7 + $0x40] sm:$0xff]
    %v411 = vld [vmem:[#allocation7 + $0x48] sm:$0xff]
    %v412 = vld [vmem:[#allocation7 + $0x50] sm:$0xff]
    %v413 = vld [vmem:[#allocation7 + $0x58] sm:$0xff]
    %v414 = vld [vmem:[#allocation7 + $0x60] sm:$0xff]
    %v415 = vld [vmem:[#allocation7 + $0x68] sm:$0xff]
    %v416 = vld [vmem:[#allocation7 + $0x70] sm:$0xff]
    %v417 = vld [vmem:[#allocation7 + $0x78] sm:$0xff]
    %v418 = vld [vmem:[#allocation7 + $0x80] sm:$0xff]
    %v419 = vld [vmem:[#allocation7 + $0x88] sm:$0xff]
    %v420 = vld [vmem:[#allocation7 + $0x90] sm:$0xff]
    %v421 = vld [vmem:[#allocation7 + $0x98] sm:$0xff]
    %v422 = vld [vmem:[#allocation7 + $0xa0] sm:$0xff]
    %v423 = vld [vmem:[#allocation7 + $0xa8] sm:$0xff]
    %v424 = vld [vmem:[#allocation7 + $0xb0] sm:$0xff]
    %v425 = vld [vmem:[#allocation7 + $0xb8] sm:$0xff]
    %v426 = vld [vmem:[#allocation7 + $0xc0] sm:$0xff]
    %v427 = vld [vmem:[#allocation7 + $0xc8] sm:$0xff]
    %v428 = vld [vmem:[#allocation7 + $0xd0] sm:$0xff]
    %v429 = vld [vmem:[#allocation7 + $0xd8] sm:$0xff]
    %v430 = vld [vmem:[#allocation7 + $0xe0] sm:$0xff]
    %v431 = vld [vmem:[#allocation7 + $0xe8] sm:$0xff]
    %v432 = vld [vmem:[#allocation7 + $0xf0] sm:$0xff]
    %v433 = vld [vmem:[#allocation7 + $0xf8] sm:$0xff]
    %v434 = vld [vmem:[#allocation7 + $0x100] sm:$0xff]
    %v435 = vld [vmem:[#allocation7 + $0x108] sm:$0xff]
    %v436 = vld [vmem:[#allocation7 + $0x110] sm:$0xff]
    %v437 = vld [vmem:[#allocation7 + $0x118] sm:$0xff]
    %v438 = vld [vmem:[#allocation7 + $0x120] sm:$0xff]
    %v439 = vld [vmem:[#allocation7 + $0x128] sm:$0xff]
    %v440 = vld [vmem:[#allocation7 + $0x130] sm:$0xff]
    %v441 = vld [vmem:[#allocation7 + $0x138] sm:$0xff]
    %v442 = vld [vmem:[#allocation7 + $0x140] sm:$0xff]
    %v443 = vld [vmem:[#allocation7 + $0x148] sm:$0xff]
    %v444 = vld [vmem:[#allocation7 + $0x150] sm:$0xff]
    %v445 = vld [vmem:[#allocation7 + $0x158] sm:$0xff]
    %v446 = vld [vmem:[#allocation7 + $0x160] sm:$0xff]
    %v447 = vld [vmem:[#allocation7 + $0x168] sm:$0xff]
    %v448 = vld [vmem:[#allocation7 + $0x170] sm:$0xff]
    %v449 = vld [vmem:[#allocation7 + $0x178] sm:$0xff]
    %v450 = vld [vmem:[#allocation7 + $0x180] sm:$0xff]
    %v451 = vld [vmem:[#allocation7 + $0x188] sm:$0xff]
    %v452 = vld [vmem:[#allocation7 + $0x190] sm:$0xff]
    %v453 = vld [vmem:[#allocation7 + $0x198] sm:$0xff]
    %v454 = vld [vmem:[#allocation7 + $0x1a0] sm:$0xff]
    %v455 = vld [vmem:[#allocation7 + $0x1a8] sm:$0xff]
    %v456 = vld [vmem:[#allocation7 + $0x1b0] sm:$0xff]
    %v457 = vld [vmem:[#allocation7 + $0x1b8] sm:$0xff]
    %v458 = vld [vmem:[#allocation7 + $0x1c0] sm:$0xff]
    %v459 = vld [vmem:[#allocation7 + $0x1c8] sm:$0xff]
    %v460 = vld [vmem:[#allocation7 + $0x1d0] sm:$0xff]
    %v461 = vld [vmem:[#allocation7 + $0x1d8] sm:$0xff]
    %v462 = vld [vmem:[#allocation7 + $0x1e0] sm:$0xff]
    %v463 = vld [vmem:[#allocation7 + $0x1e8] sm:$0xff]
    %v464 = vld [vmem:[#allocation7 + $0x1f0] sm:$0xff]
    %v465 = vld [vmem:[#allocation7 + $0x1f8] sm:$0xff]
    %v466 = vld [vmem:[#allocation7 + $0x200] sm:$0xff]
    %v467 = vld [vmem:[#allocation7 + $0x208] sm:$0xff]
    %v468 = vld [vmem:[#allocation7 + $0x210] sm:$0xff]
    %v469 = vld [vmem:[#allocation7 + $0x218] sm:$0xff]
    %v470 = vld [vmem:[#allocation7 + $0x220] sm:$0xff]
    %v471 = vld [vmem:[#allocation7 + $0x228] sm:$0xff]
    %v472 = vld [vmem:[#allocation7 + $0x230] sm:$0xff]
    %v473 = vld [vmem:[#allocation7 + $0x238] sm:$0xff]
    %v474 = vld [vmem:[#allocation7 + $0x240] sm:$0xff]
    %v475 = vld [vmem:[#allocation7 + $0x248] sm:$0xff]
    %v476 = vld [vmem:[#allocation7 + $0x250] sm:$0xff]
    %v477 = vld [vmem:[#allocation7 + $0x258] sm:$0xff]
    %v478 = vld [vmem:[#allocation7 + $0x260] sm:$0xff]
    %v479 = vld [vmem:[#allocation7 + $0x268] sm:$0xff]
    %v480 = vld [vmem:[#allocation7 + $0x270] sm:$0xff]
    %v481 = vld [vmem:[#allocation7 + $0x278] sm:$0xff]
    %v482 = vld [vmem:[#allocation7 + $0x280] sm:$0xff]
    %v483 = vld [vmem:[#allocation7 + $0x288] sm:$0xff]
    %v484 = vld [vmem:[#allocation7 + $0x290] sm:$0xff]
    %v485 = vld [vmem:[#allocation7 + $0x298] sm:$0xff]
    %v486 = vld [vmem:[#allocation7 + $0x2a0] sm:$0xff]
    %v487 = vld [vmem:[#allocation7 + $0x2a8] sm:$0xff]
    %v488 = vld [vmem:[#allocation7 + $0x2b0] sm:$0xff]
    %v489 = vld [vmem:[#allocation7 + $0x2b8] sm:$0xff]
    %v490 = vld [vmem:[#allocation7 + $0x2c0] sm:$0xff]
    %v491 = vld [vmem:[#allocation7 + $0x2c8] sm:$0xff]
    %v492 = vld [vmem:[#allocation7 + $0x2d0] sm:$0xff]
    %v493 = vld [vmem:[#allocation7 + $0x2d8] sm:$0xff]
    %v494 = vld [vmem:[#allocation7 + $0x2e0] sm:$0xff]
    %v495 = vld [vmem:[#allocation7 + $0x2e8] sm:$0xff]
    %v496 = vld [vmem:[#allocation7 + $0x2f0] sm:$0xff]
    %v497 = vld [vmem:[#allocation7 + $0x2f8] sm:$0xff]
    %v498 = vld [vmem:[#allocation7 + $0x300] sm:$0xff]
    %v499 = vld [vmem:[#allocation7 + $0x308] sm:$0xff]
    %v500 = vld [vmem:[#allocation7 + $0x310] sm:$0xff]
    %v501 = vld [vmem:[#allocation7 + $0x318] sm:$0xff]
    %v502 = vld [vmem:[#allocation7 + $0x320] sm:$0xff]
    %v503 = vld [vmem:[#allocation7 + $0x328] sm:$0xff]
    %v504 = vld [vmem:[#allocation7 + $0x330] sm:$0xff]
    %v505 = vld [vmem:[#allocation7 + $0x338] sm:$0xff]
    %v506 = vld [vmem:[#allocation7 + $0x340] sm:$0xff]
    %v507 = vld [vmem:[#allocation7 + $0x348] sm:$0xff]
    %v508 = vld [vmem:[#allocation7 + $0x350] sm:$0xff]
    %v509 = vld [vmem:[#allocation7 + $0x358] sm:$0xff]
    %v510 = vld [vmem:[#allocation7 + $0x360] sm:$0xff]
    %v511 = vld [vmem:[#allocation7 + $0x368] sm:$0xff]
    %v512 = vld [vmem:[#allocation7 + $0x370] sm:$0xff]
    %v513 = vld [vmem:[#allocation7 + $0x378] sm:$0xff]
    %v514 = vld [vmem:[#allocation7 + $0x380] sm:$0xff]
    %v515 = vld [vmem:[#allocation7 + $0x388] sm:$0xff]
    %v516 = vld [vmem:[#allocation7 + $0x390] sm:$0xff]
    %v517 = vld [vmem:[#allocation7 + $0x398] sm:$0xff]
    %v518 = vld [vmem:[#allocation7 + $0x3a0] sm:$0xff]
    %v519 = vld [vmem:[#allocation7 + $0x3a8] sm:$0xff]
    %v520 = vld [vmem:[#allocation7 + $0x3b0] sm:$0xff]
    %v521 = vld [vmem:[#allocation7 + $0x3b8] sm:$0xff]
    %v522 = vld [vmem:[#allocation7 + $0x3c0] sm:$0xff]
    %v523 = vld [vmem:[#allocation7 + $0x3c8] sm:$0xff]
    %v524 = vld [vmem:[#allocation7 + $0x3d0] sm:$0xff]
    %v525 = vld [vmem:[#allocation7 + $0x3d8] sm:$0xff]
    %v526 = vld [vmem:[#allocation7 + $0x3e0] sm:$0xff]
    %v527 = vld [vmem:[#allocation7 + $0x3e8] sm:$0xff]
    %v528 = vld [vmem:[#allocation7 + $0x3f0] sm:$0xff]
    %v529 = vld [vmem:[#allocation7 + $0x3f8] sm:$0xff]
    %v530 = vld [vmem:[%s8] sm:$0xf]
    %v532 = vlaneseq
    %v533 = vshrl.u32 %v532, 7
    %v534 = vsub.s32 0, %v533
    %v535 = vrot.slane %v530, %v534
    %v536 = vlaneseq
    %v537 = vshrl.u32 %v536, 7
    %v538 = vsub.s32 1, %v537
    %v539 = vrot.slane %v530, %v538
    %v540 = vlaneseq
    %v541 = vshrl.u32 %v540, 7
    %v542 = vsub.s32 2, %v541
    %v543 = vrot.slane %v530, %v542
    %v544 = vlaneseq
    %v545 = vshrl.u32 %v544, 7
    %v546 = vsub.s32 3, %v545
    %v547 = vrot.slane %v530, %v546
    %552 = vmatprep.subr.mxu0 %v403
    %553 = vmatpush1.msra.mxu0 %v402
    %554 = vmatprep.subr.mxu0 %v407
    %555 = vmatpush1.msra.mxu0 %v406
    %556 = vmatprep.subr.mxu0 %v411
    %557 = vmatpush1.msra.mxu0 %v410
    %558 = vmatprep.subr.mxu0 %v415
    %559 = vmatpush1.msra.mxu0 %v414
    %560 = vmatprep.subr.mxu0 %v419
    %561 = vmatpush1.msra.mxu0 %v418
    %562 = vmatprep.subr.mxu0 %v423
    %563 = vmatpush1.msra.mxu0 %v422
    %564 = vmatprep.subr.mxu0 %v427
    %565 = vmatpush1.msra.mxu0 %v426
    %566 = vmatprep.subr.mxu0 %v431
    %567 = vmatpush1.msra.mxu0 %v430
    %568 = vmatprep.subr.mxu0 %v435
    %569 = vmatpush1.msra.mxu0 %v434
    %570 = vmatprep.subr.mxu0 %v439
    %571 = vmatpush1.msra.mxu0 %v438
    %572 = vmatprep.subr.mxu0 %v443
    %573 = vmatpush1.msra.mxu0 %v442
    %574 = vmatprep.subr.mxu0 %v447
    %575 = vmatpush1.msra.mxu0 %v446
    %576 = vmatprep.subr.mxu0 %v451
    %577 = vmatpush1.msra.mxu0 %v450
    %578 = vmatprep.subr.mxu0 %v455
    %579 = vmatpush1.msra.mxu0 %v454
    %580 = vmatprep.subr.mxu0 %v459
    %581 = vmatpush1.msra.mxu0 %v458
    %582 = vmatprep.subr.mxu0 %v463
    %583 = vmatpush1.msra.mxu0 %v462
    %584 = vmatprep.subr.mxu0 %v467
    %585 = vmatpush1.msra.mxu0 %v466
    %586 = vmatprep.subr.mxu0 %v471
    %587 = vmatpush1.msra.mxu0 %v470
    %588 = vmatprep.subr.mxu0 %v475
    %589 = vmatpush1.msra.mxu0 %v474
    %590 = vmatprep.subr.mxu0 %v479
    %591 = vmatpush1.msra.mxu0 %v478
    %592 = vmatprep.subr.mxu0 %v483
    %593 = vmatpush1.msra.mxu0 %v482
    %594 = vmatprep.subr.mxu0 %v487
    %595 = vmatpush1.msra.mxu0 %v486
    %596 = vmatprep.subr.mxu0 %v491
    %597 = vmatpush1.msra.mxu0 %v490
    %598 = vmatprep.subr.mxu0 %v495
    %599 = vmatpush1.msra.mxu0 %v494
    %600 = vmatprep.subr.mxu0 %v499
    %601 = vmatpush1.msra.mxu0 %v498
    %602 = vmatprep.subr.mxu0 %v503
    %603 = vmatpush1.msra.mxu0 %v502
    %604 = vmatprep.subr.mxu0 %v507
    %605 = vmatpush1.msra.mxu0 %v506
    %606 = vmatprep.subr.mxu0 %v511
    %607 = vmatpush1.msra.mxu0 %v510
    %608 = vmatprep.subr.mxu0 %v515
    %609 = vmatpush1.msra.mxu0 %v514
    %610 = vmatprep.subr.mxu0 %v519
    %611 = vmatpush1.msra.mxu0 %v518
    %612 = vmatprep.subr.mxu0 %v523
    %613 = vmatpush1.msra.mxu0 %v522
    %614 = vmatprep.subr.mxu0 %v527
    %615 = vmatpush1.msra.mxu0 %v526
    %616 = vmatprep.mubr.f32.mxu0 %v401
    %617 = vmatmul.mubr.f32.gmra.mrb[0].mxu0 %v400
    %v618 = vpop.f32.mrb[0].mxu0
    %v619 = vadd.f32 %v535, %v618
    %v620 = vpop.f32.mrb[0].mxu0
    %v621 = vadd.f32 %v539, %v620
    %622 = vdwg.mxu0
    %623 = vmatprep.subr.mxu0 %v405
    %624 = vmatpush1.msra.mxu0 %v404
    %625 = vmatprep.subr.mxu0 %v409
    %626 = vmatpush1.msra.mxu0 %v408
    %627 = vmatprep.subr.mxu0 %v413
    %628 = vmatpush1.msra.mxu0 %v412
    %629 = vmatprep.subr.mxu0 %v417
    %630 = vmatpush1.msra.mxu0 %v416
    %631 = vmatprep.subr.mxu0 %v421
    %632 = vmatpush1.msra.mxu0 %v420
    %633 = vmatprep.subr.mxu0 %v425
    %634 = vmatpush1.msra.mxu0 %v424
    %635 = vmatprep.subr.mxu0 %v429
    %636 = vmatpush1.msra.mxu0 %v428
    %637 = vmatprep.subr.mxu0 %v433
    %638 = vmatpush1.msra.mxu0 %v432
    %639 = vmatprep.subr.mxu0 %v437
    %640 = vmatpush1.msra.mxu0 %v436
    %641 = vmatprep.subr.mxu0 %v441
    %642 = vmatpush1.msra.mxu0 %v440
    %643 = vmatprep.subr.mxu0 %v445
    %644 = vmatpush1.msra.mxu0 %v444
    %645 = vmatprep.subr.mxu0 %v449
    %646 = vmatpush1.msra.mxu0 %v448
    %647 = vmatprep.subr.mxu0 %v453
    %648 = vmatpush1.msra.mxu0 %v452
    %649 = vmatprep.subr.mxu0 %v457
    %650 = vmatpush1.msra.mxu0 %v456
    %651 = vmatprep.subr.mxu0 %v461
    %652 = vmatpush1.msra.mxu0 %v460
    %653 = vmatprep.subr.mxu0 %v465
    %654 = vmatpush1.msra.mxu0 %v464
    %655 = vmatprep.subr.mxu0 %v469
    %656 = vmatpush1.msra.mxu0 %v468
    %657 = vmatprep.subr.mxu0 %v473
    %658 = vmatpush1.msra.mxu0 %v472
    %659 = vmatprep.subr.mxu0 %v477
    %660 = vmatpush1.msra.mxu0 %v476
    %661 = vmatprep.subr.mxu0 %v481
    %662 = vmatpush1.msra.mxu0 %v480
    %663 = vmatprep.subr.mxu0 %v485
    %664 = vmatpush1.msra.mxu0 %v484
    %665 = vmatprep.subr.mxu0 %v489
    %666 = vmatpush1.msra.mxu0 %v488
    %667 = vmatprep.subr.mxu0 %v493
    %668 = vmatpush1.msra.mxu0 %v492
    %669 = vmatprep.subr.mxu0 %v497
    %670 = vmatpush1.msra.mxu0 %v496
    %671 = vmatprep.subr.mxu0 %v501
    %672 = vmatpush1.msra.mxu0 %v500
    %673 = vmatprep.subr.mxu0 %v505
    %674 = vmatpush1.msra.mxu0 %v504
    %675 = vmatprep.subr.mxu0 %v509
    %676 = vmatpush1.msra.mxu0 %v508
    %677 = vmatprep.subr.mxu0 %v513
    %678 = vmatpush1.msra.mxu0 %v512
    %679 = vmatprep.subr.mxu0 %v517
    %680 = vmatpush1.msra.mxu0 %v516
    %681 = vmatprep.subr.mxu0 %v521
    %682 = vmatpush1.msra.mxu0 %v520
    %683 = vmatprep.subr.mxu0 %v525
    %684 = vmatpush1.msra.mxu0 %v524
    %685 = vmatprep.subr.mxu0 %v529
    %686 = vmatpush1.msra.mxu0 %v528
    %687 = vmatprep.mubr.f32.mxu0 %v401
    %688 = vmatmul.mubr.f32.gmra.mrb[0].mxu0 %v400
    %v689 = vpop.f32.mrb[0].mxu0
    %v690 = vadd.f32 %v543, %v689
    %v691 = vpop.f32.mrb[0].mxu0
    %v692 = vadd.f32 %v547, %v691
    %693 = vdwg.mxu0
    %694 = vmax.xlane.f32.xlu0 %v619
    %v695 = vpop.xlane.xlu0 %694
    %v696 = vsub.f32 %v619, %v695
    %v697 = vmul.f32 %v696, 1.442695
    %v698 = vpow.pop %v697
    %699 = vmax.xlane.f32.xlu0 %v621
    %v700 = vpop.xlane.xlu0 %699
    %v701 = vsub.f32 %v621, %v700
    %v702 = vmul.f32 %v701, 1.442695
    %v703 = vpow.pop %v702
    %704 = vmax.xlane.f32.xlu0 %v690
    %v705 = vpop.xlane.xlu0 %704
    %v706 = vsub.f32 %v690, %v705
    %v707 = vmul.f32 %v706, 1.442695
    %v708 = vpow.pop %v707
    %709 = vmax.xlane.f32.xlu0 %v692
    %v710 = vpop.xlane.xlu0 %709
    %v711 = vsub.f32 %v692, %v710
    %v712 = vmul.f32 %v711, 1.442695
    %v713 = vpow.pop %v712
    %v714 = vld [vmem:[%s10] sm:$0xff]
    %v715 = vld [vmem:[%s10 + $0x8] sm:$0xff]
    %v716 = vld [vmem:[%s10 + $0x10] sm:$0xff]
    %v717 = vld [vmem:[%s10 + $0x18] sm:$0xff]
    %v718 = vld [vmem:[%s10 + $0x20] sm:$0xff]
    %v719 = vld [vmem:[%s10 + $0x28] sm:$0xff]
    %v720 = vld [vmem:[%s10 + $0x30] sm:$0xff]
    %v721 = vld [vmem:[%s10 + $0x38] sm:$0xff]
    %v722 = vld [vmem:[%s10 + $0x40] sm:$0xff]
    %v723 = vld [vmem:[%s10 + $0x48] sm:$0xff]
    %v724 = vld [vmem:[%s10 + $0x50] sm:$0xff]
    %v725 = vld [vmem:[%s10 + $0x58] sm:$0xff]
    %v726 = vld [vmem:[%s10 + $0x60] sm:$0xff]
    %v727 = vld [vmem:[%s10 + $0x68] sm:$0xff]
    %v728 = vld [vmem:[%s10 + $0x70] sm:$0xff]
    %v729 = vld [vmem:[%s10 + $0x78] sm:$0xff]
    %v730 = vld [vmem:[%s10 + $0x80] sm:$0xff]
    %v731 = vld [vmem:[%s10 + $0x88] sm:$0xff]
    %v732 = vld [vmem:[%s10 + $0x90] sm:$0xff]
    %v733 = vld [vmem:[%s10 + $0x98] sm:$0xff]
    %v734 = vld [vmem:[%s10 + $0xa0] sm:$0xff]
    %v735 = vld [vmem:[%s10 + $0xa8] sm:$0xff]
    %v736 = vld [vmem:[%s10 + $0xb0] sm:$0xff]
    %v737 = vld [vmem:[%s10 + $0xb8] sm:$0xff]
    %v738 = vld [vmem:[%s10 + $0xc0] sm:$0xff]
    %v739 = vld [vmem:[%s10 + $0xc8] sm:$0xff]
    %v740 = vld [vmem:[%s10 + $0xd0] sm:$0xff]
    %v741 = vld [vmem:[%s10 + $0xd8] sm:$0xff]
    %v742 = vld [vmem:[%s10 + $0xe0] sm:$0xff]
    %v743 = vld [vmem:[%s10 + $0xe8] sm:$0xff]
    %v744 = vld [vmem:[%s10 + $0xf0] sm:$0xff]
    %v745 = vld [vmem:[%s10 + $0xf8] sm:$0xff]
    %v746 = vld [vmem:[%s10 + $0x100] sm:$0xff]
    %v747 = vld [vmem:[%s10 + $0x108] sm:$0xff]
    %v748 = vld [vmem:[%s10 + $0x110] sm:$0xff]
    %v749 = vld [vmem:[%s10 + $0x118] sm:$0xff]
    %v750 = vld [vmem:[%s10 + $0x120] sm:$0xff]
    %v751 = vld [vmem:[%s10 + $0x128] sm:$0xff]
    %v752 = vld [vmem:[%s10 + $0x130] sm:$0xff]
    %v753 = vld [vmem:[%s10 + $0x138] sm:$0xff]
    %v754 = vld [vmem:[%s10 + $0x140] sm:$0xff]
    %v755 = vld [vmem:[%s10 + $0x148] sm:$0xff]
    %v756 = vld [vmem:[%s10 + $0x150] sm:$0xff]
    %v757 = vld [vmem:[%s10 + $0x158] sm:$0xff]
    %v758 = vld [vmem:[%s10 + $0x160] sm:$0xff]
    %v759 = vld [vmem:[%s10 + $0x168] sm:$0xff]
    %v760 = vld [vmem:[%s10 + $0x170] sm:$0xff]
    %v761 = vld [vmem:[%s10 + $0x178] sm:$0xff]
    %v762 = vld [vmem:[%s10 + $0x180] sm:$0xff]
    %v763 = vld [vmem:[%s10 + $0x188] sm:$0xff]
    %v764 = vld [vmem:[%s10 + $0x190] sm:$0xff]
    %v765 = vld [vmem:[%s10 + $0x198] sm:$0xff]
    %v766 = vld [vmem:[%s10 + $0x1a0] sm:$0xff]
    %v767 = vld [vmem:[%s10 + $0x1a8] sm:$0xff]
    %v768 = vld [vmem:[%s10 + $0x1b0] sm:$0xff]
    %v769 = vld [vmem:[%s10 + $0x1b8] sm:$0xff]
    %v770 = vld [vmem:[%s10 + $0x1c0] sm:$0xff]
    %v771 = vld [vmem:[%s10 + $0x1c8] sm:$0xff]
    %v772 = vld [vmem:[%s10 + $0x1d0] sm:$0xff]
    %v773 = vld [vmem:[%s10 + $0x1d8] sm:$0xff]
    %v774 = vld [vmem:[%s10 + $0x1e0] sm:$0xff]
    %v775 = vld [vmem:[%s10 + $0x1e8] sm:$0xff]
    %v776 = vld [vmem:[%s10 + $0x1f0] sm:$0xff]
    %v777 = vld [vmem:[%s10 + $0x1f8] sm:$0xff]
    %778 = vmatprep.subr.mxu0 0.0
    %779 = vmatpush1.msra.mxu0 %v714
    %780 = vmatprep.subr.mxu0 0.0
    %781 = vmatpush1.msra.mxu0 %v715
    %782 = vmatprep.subr.mxu0 0.0
    %783 = vmatpush1.msra.mxu0 %v716
    %784 = vmatprep.subr.mxu0 0.0
    %785 = vmatpush1.msra.mxu0 %v717
    %786 = vmatprep.subr.mxu0 0.0
    %787 = vmatpush1.msra.mxu0 %v718
    %788 = vmatprep.subr.mxu0 0.0
    %789 = vmatpush1.msra.mxu0 %v719
    %790 = vmatprep.subr.mxu0 0.0
    %791 = vmatpush1.msra.mxu0 %v720
    %792 = vmatprep.subr.mxu0 0.0
    %793 = vmatpush1.msra.mxu0 %v721
    %794 = vmatprep.subr.mxu0 0.0
    %795 = vmatpush1.msra.mxu0 %v722
    %796 = vmatprep.subr.mxu0 0.0
    %797 = vmatpush1.msra.mxu0 %v723
    %798 = vmatprep.subr.mxu0 0.0
    %799 = vmatpush1.msra.mxu0 %v724
    %800 = vmatprep.subr.mxu0 0.0
    %801 = vmatpush1.msra.mxu0 %v725
    %802 = vmatprep.subr.mxu0 0.0
    %803 = vmatpush1.msra.mxu0 %v726
    %804 = vmatprep.subr.mxu0 0.0
    %805 = vmatpush1.msra.mxu0 %v727
    %806 = vmatprep.subr.mxu0 0.0
    %807 = vmatpush1.msra.mxu0 %v728
    %808 = vmatprep.subr.mxu0 0.0
    %809 = vmatpush1.msra.mxu0 %v729
    %810 = vmatprep.subr.mxu0 0.0
    %811 = vmatpush1.msra.mxu0 %v730
    %812 = vmatprep.subr.mxu0 0.0
    %813 = vmatpush1.msra.mxu0 %v731
    %814 = vmatprep.subr.mxu0 0.0
    %815 = vmatpush1.msra.mxu0 %v732
    %816 = vmatprep.subr.mxu0 0.0
    %817 = vmatpush1.msra.mxu0 %v733
    %818 = vmatprep.subr.mxu0 0.0
    %819 = vmatpush1.msra.mxu0 %v734
    %820 = vmatprep.subr.mxu0 0.0
    %821 = vmatpush1.msra.mxu0 %v735
    %822 = vmatprep.subr.mxu0 0.0
    %823 = vmatpush1.msra.mxu0 %v736
    %824 = vmatprep.subr.mxu0 0.0
    %825 = vmatpush1.msra.mxu0 %v737
    %826 = vmatprep.subr.mxu0 0.0
    %827 = vmatpush1.msra.mxu0 %v738
    %828 = vmatprep.subr.mxu0 0.0
    %829 = vmatpush1.msra.mxu0 %v739
    %830 = vmatprep.subr.mxu0 0.0
    %831 = vmatpush1.msra.mxu0 %v740
    %832 = vmatprep.subr.mxu0 0.0
    %833 = vmatpush1.msra.mxu0 %v741
    %834 = vmatprep.subr.mxu0 0.0
    %835 = vmatpush1.msra.mxu0 %v742
    %836 = vmatprep.subr.mxu0 0.0
    %837 = vmatpush1.msra.mxu0 %v743
    %838 = vmatprep.subr.mxu0 0.0
    %839 = vmatpush1.msra.mxu0 %v744
    %840 = vmatprep.subr.mxu0 0.0
    %841 = vmatpush1.msra.mxu0 %v745
    %842 = vmatprep.mubr.f32.mxu0 %v703
    %843 = vmatmul.mubr.f32.gmra.mrb[0].mxu0 %v698
    %v844 = vpop.f32.mrb[0].mxu0
    %v845 = vadd.f32 0.0, %v844
    %v846 = vpop.f32.mrb[0].mxu0
    %847 = vdwg.mxu0
    %848 = vmatprep.subr.mxu0 0.0
    %849 = vmatpush1.msra.mxu0 %v746
    %850 = vmatprep.subr.mxu0 0.0
    %851 = vmatpush1.msra.mxu0 %v747
    %852 = vmatprep.subr.mxu0 0.0
    %853 = vmatpush1.msra.mxu0 %v748
    %854 = vmatprep.subr.mxu0 0.0
    %855 = vmatpush1.msra.mxu0 %v749
    %856 = vmatprep.subr.mxu0 0.0
    %857 = vmatpush1.msra.mxu0 %v750
    %858 = vmatprep.subr.mxu0 0.0
    %859 = vmatpush1.msra.mxu0 %v751
    %860 = vmatprep.subr.mxu0 0.0
    %861 = vmatpush1.msra.mxu0 %v752
    %862 = vmatprep.subr.mxu0 0.0
    %863 = vmatpush1.msra.mxu0 %v753
    %864 = vmatprep.subr.mxu0 0.0
    %865 = vmatpush1.msra.mxu0 %v754
    %866 = vmatprep.subr.mxu0 0.0
    %867 = vmatpush1.msra.mxu0 %v755
    %868 = vmatprep.subr.mxu0 0.0
    %869 = vmatpush1.msra.mxu0 %v756
    %870 = vmatprep.subr.mxu0 0.0
    %871 = vmatpush1.msra.mxu0 %v757
    %872 = vmatprep.subr.mxu0 0.0
    %873 = vmatpush1.msra.mxu0 %v758
    %874 = vmatprep.subr.mxu0 0.0
    %875 = vmatpush1.msra.mxu0 %v759
    %876 = vmatprep.subr.mxu0 0.0
    %877 = vmatpush1.msra.mxu0 %v760
    %878 = vmatprep.subr.mxu0 0.0
    %879 = vmatpush1.msra.mxu0 %v761
    %880 = vmatprep.subr.mxu0 0.0
    %881 = vmatpush1.msra.mxu0 %v762
    %882 = vmatprep.subr.mxu0 0.0
    %883 = vmatpush1.msra.mxu0 %v763
    %884 = vmatprep.subr.mxu0 0.0
    %885 = vmatpush1.msra.mxu0 %v764
    %886 = vmatprep.subr.mxu0 0.0
    %887 = vmatpush1.msra.mxu0 %v765
    %888 = vmatprep.subr.mxu0 0.0
    %889 = vmatpush1.msra.mxu0 %v766
    %890 = vmatprep.subr.mxu0 0.0
    %891 = vmatpush1.msra.mxu0 %v767
    %892 = vmatprep.subr.mxu0 0.0
    %893 = vmatpush1.msra.mxu0 %v768
    %894 = vmatprep.subr.mxu0 0.0
    %895 = vmatpush1.msra.mxu0 %v769
    %896 = vmatprep.subr.mxu0 0.0
    %897 = vmatpush1.msra.mxu0 %v770
    %898 = vmatprep.subr.mxu0 0.0
    %899 = vmatpush1.msra.mxu0 %v771
    %900 = vmatprep.subr.mxu0 0.0
    %901 = vmatpush1.msra.mxu0 %v772
    %902 = vmatprep.subr.mxu0 0.0
    %903 = vmatpush1.msra.mxu0 %v773
    %904 = vmatprep.subr.mxu0 0.0
    %905 = vmatpush1.msra.mxu0 %v774
    %906 = vmatprep.subr.mxu0 0.0
    %907 = vmatpush1.msra.mxu0 %v775
    %908 = vmatprep.subr.mxu0 0.0
    %909 = vmatpush1.msra.mxu0 %v776
    %910 = vmatprep.subr.mxu0 0.0
    %911 = vmatpush1.msra.mxu0 %v777
    %912 = vmatprep.mubr.f32.mxu0 %v713
    %913 = vmatmul.mubr.f32.gmra.mrb[0].mxu0 %v708
    %v914 = vpop.f32.mrb[0].mxu0
    %v915 = vadd.f32 %v845, %v914
    %v916 = vpop.f32.mrb[0].mxu0
    %917 = vdwg.mxu0
    %v918 = vrcp.pop %v915
    %v919 = vld [vmem:[%s9] sm:$0xff]
    %v920 = vld [vmem:[%s9 + $0x8] sm:$0xff]
    %v921 = vld [vmem:[%s9 + $0x10] sm:$0xff]
    %v922 = vld [vmem:[%s9 + $0x18] sm:$0xff]
    %vm923 = vcmask 64512
    %v925 = vsel %vm923, %v918, 0
    %927 = vmatprep.subr.mxu0 %v920
    %928 = vmatpush1.msra.mxu0 %v919
    %929 = vmatprep.subr.mxu0 0.0
    %930 = vmatpush1.msra.mxu0 0.0
    %931 = vmatprep.subr.mxu0 0.0
    %932 = vmatpush1.msra.mxu0 0.0
    %933 = vmatprep.subr.mxu0 0.0
    %934 = vmatpush1.msra.mxu0 0.0
    %935 = vmatprep.subr.mxu0 0.0
    %936 = vmatpush1.msra.mxu0 0.0
    %937 = vmatprep.subr.mxu0 0.0
    %938 = vmatpush1.msra.mxu0 0.0
    %939 = vmatprep.subr.mxu0 0.0
    %940 = vmatpush1.msra.mxu0 0.0
    %941 = vmatprep.subr.mxu0 0.0
    %942 = vmatpush1.msra.mxu0 0.0
    %943 = vmatprep.subr.mxu0 0.0
    %944 = vmatpush1.msra.mxu0 0.0
    %945 = vmatprep.subr.mxu0 0.0
    %946 = vmatpush1.msra.mxu0 0.0
    %947 = vmatprep.subr.mxu0 0.0
    %948 = vmatpush1.msra.mxu0 0.0
    %949 = vmatprep.subr.mxu0 0.0
    %950 = vmatpush1.msra.mxu0 0.0
    %951 = vmatprep.subr.mxu0 0.0
    %952 = vmatpush1.msra.mxu0 0.0
    %953 = vmatprep.subr.mxu0 0.0
    %954 = vmatpush1.msra.mxu0 0.0
    %955 = vmatprep.subr.mxu0 0.0
    %956 = vmatpush1.msra.mxu0 0.0
    %957 = vmatprep.subr.mxu0 0.0
    %958 = vmatpush1.msra.mxu0 0.0
    %959 = vmatprep.subr.mxu0 0.0
    %960 = vmatpush1.msra.mxu0 0.0
    %961 = vmatprep.subr.mxu0 0.0
    %962 = vmatpush1.msra.mxu0 0.0
    %963 = vmatprep.subr.mxu0 0.0
    %964 = vmatpush1.msra.mxu0 0.0
    %965 = vmatprep.subr.mxu0 0.0
    %966 = vmatpush1.msra.mxu0 0.0
    %967 = vmatprep.subr.mxu0 0.0
    %968 = vmatpush1.msra.mxu0 0.0
    %969 = vmatprep.subr.mxu0 0.0
    %970 = vmatpush1.msra.mxu0 0.0
    %971 = vmatprep.subr.mxu0 0.0
    %972 = vmatpush1.msra.mxu0 0.0
    %973 = vmatprep.subr.mxu0 0.0
    %974 = vmatpush1.msra.mxu0 0.0
    %975 = vmatprep.subr.mxu0 0.0
    %976 = vmatpush1.msra.mxu0 0.0
    %977 = vmatprep.subr.mxu0 0.0
    %978 = vmatpush1.msra.mxu0 0.0
    %979 = vmatprep.subr.mxu0 0.0
    %980 = vmatpush1.msra.mxu0 0.0
    %981 = vmatprep.subr.mxu0 0.0
    %982 = vmatpush1.msra.mxu0 0.0
    %983 = vmatprep.subr.mxu0 0.0
    %984 = vmatpush1.msra.mxu0 0.0
    %985 = vmatprep.subr.mxu0 0.0
    %986 = vmatpush1.msra.mxu0 0.0
    %987 = vmatprep.subr.mxu0 0.0
    %988 = vmatpush1.msra.mxu0 0.0
    %989 = vmatprep.subr.mxu0 0.0
    %990 = vmatpush1.msra.mxu0 0.0
    %991 = vmatprep.mubr.f32.mxu0 0.0
    %992 = vmatmul.mubr.f32.gmra.mrb[0].mxu0 %v925
    %v993 = vpop.f32.mrb[0].mxu0
    %v994 = vadd.f32 0.0, %v993
    %v995 = vpop.f32.mrb[0].mxu0
    %v996 = vadd.f32 0.0, %v995
    %997 = vdwg.mxu0
    %998 = vmatprep.subr.mxu0 %v922
    %999 = vmatpush1.msra.mxu0 %v921
    %1000 = vmatprep.subr.mxu0 0.0
    %1001 = vmatpush1.msra.mxu0 0.0
    %1002 = vmatprep.subr.mxu0 0.0
    %1003 = vmatpush1.msra.mxu0 0.0
    %1004 = vmatprep.subr.mxu0 0.0
    %1005 = vmatpush1.msra.mxu0 0.0
    %1006 = vmatprep.subr.mxu0 0.0
    %1007 = vmatpush1.msra.mxu0 0.0
    %1008 = vmatprep.subr.mxu0 0.0
    %1009 = vmatpush1.msra.mxu0 0.0
    %1010 = vmatprep.subr.mxu0 0.0
    %1011 = vmatpush1.msra.mxu0 0.0
    %1012 = vmatprep.subr.mxu0 0.0
    %1013 = vmatpush1.msra.mxu0 0.0
    %1014 = vmatprep.subr.mxu0 0.0
    %1015 = vmatpush1.msra.mxu0 0.0
    %1016 = vmatprep.subr.mxu0 0.0
    %1017 = vmatpush1.msra.mxu0 0.0
    %1018 = vmatprep.subr.mxu0 0.0
    %1019 = vmatpush1.msra.mxu0 0.0
    %1020 = vmatprep.subr.mxu0 0.0
    %1021 = vmatpush1.msra.mxu0 0.0
    %1022 = vmatprep.subr.mxu0 0.0
    %1023 = vmatpush1.msra.mxu0 0.0
    %1024 = vmatprep.subr.mxu0 0.0
    %1025 = vmatpush1.msra.mxu0 0.0
    %1026 = vmatprep.subr.mxu0 0.0
    %1027 = vmatpush1.msra.mxu0 0.0
    %1028 = vmatprep.subr.mxu0 0.0
    %1029 = vmatpush1.msra.mxu0 0.0
    %1030 = vmatprep.subr.mxu0 0.0
    %1031 = vmatpush1.msra.mxu0 0.0
    %1032 = vmatprep.subr.mxu0 0.0
    %1033 = vmatpush1.msra.mxu0 0.0
    %1034 = vmatprep.subr.mxu0 0.0
    %1035 = vmatpush1.msra.mxu0 0.0
    %1036 = vmatprep.subr.mxu0 0.0
    %1037 = vmatpush1.msra.mxu0 0.0
    %1038 = vmatprep.subr.mxu0 0.0
    %1039 = vmatpush1.msra.mxu0 0.0
    %1040 = vmatprep.subr.mxu0 0.0
    %1041 = vmatpush1.msra.mxu0 0.0
    %1042 = vmatprep.subr.mxu0 0.0
    %1043 = vmatpush1.msra.mxu0 0.0
    %1044 = vmatprep.subr.mxu0 0.0
    %1045 = vmatpush1.msra.mxu0 0.0
    %1046 = vmatprep.subr.mxu0 0.0
    %1047 = vmatpush1.msra.mxu0 0.0
    %1048 = vmatprep.subr.mxu0 0.0
    %1049 = vmatpush1.msra.mxu0 0.0
    %1050 = vmatprep.subr.mxu0 0.0
    %1051 = vmatpush1.msra.mxu0 0.0
    %1052 = vmatprep.subr.mxu0 0.0
    %1053 = vmatpush1.msra.mxu0 0.0
    %1054 = vmatprep.subr.mxu0 0.0
    %1055 = vmatpush1.msra.mxu0 0.0
    %1056 = vmatprep.subr.mxu0 0.0
    %1057 = vmatpush1.msra.mxu0 0.0
    %1058 = vmatprep.subr.mxu0 0.0
    %1059 = vmatpush1.msra.mxu0 0.0
    %1060 = vmatprep.subr.mxu0 0.0
    %1061 = vmatpush1.msra.mxu0 0.0
    %1062 = vmatprep.mubr.f32.mxu0 0.0
    %1063 = vmatmul.mubr.f32.gmra.mrb[0].mxu0 %v925
    %v1064 = vpop.f32.mrb[0].mxu0
    %v1065 = vadd.f32 0.0, %v1064
    %v1066 = vpop.f32.mrb[0].mxu0
    %v1067 = vadd.f32 0.0, %v1066
    %1068 = vdwg.mxu0
    %v1069 = vmul.f32 %v698, %v994
    %v1070 = vmul.f32 %v703, %v996
    %v1071 = vmul.f32 %v708, %v1065
    %v1072 = vmul.f32 %v713, %v1067
    %v1073 = vmax.f32 %v1069, 0.001
    %v1074 = vmax.f32 %v1070, 0.001
    %v1075 = vmax.f32 %v1071, 0.001
    %v1076 = vmax.f32 %v1072, 0.001
    %v1077 = vld [vmem:[%s11] sm:$0xff]
    %v1078 = vld [vmem:[%s11 + $0x8] sm:$0xff]
    %v1079 = vld [vmem:[%s11 + $0x10] sm:$0xff]
    %v1080 = vld [vmem:[%s11 + $0x18] sm:$0xff]
    %v1081 = vld [vmem:[%s11 + $0x20] sm:$0xff]
    %v1082 = vld [vmem:[%s11 + $0x28] sm:$0xff]
    %v1083 = vld [vmem:[%s11 + $0x30] sm:$0xff]
    %v1084 = vld [vmem:[%s11 + $0x38] sm:$0xff]
    %v1085 = vld [vmem:[%s11 + $0x40] sm:$0xff]
    %v1086 = vld [vmem:[%s11 + $0x48] sm:$0xff]
    %v1087 = vld [vmem:[%s11 + $0x50] sm:$0xff]
    %v1088 = vld [vmem:[%s11 + $0x58] sm:$0xff]
    %v1089 = vld [vmem:[%s11 + $0x60] sm:$0xff]
    %v1090 = vld [vmem:[%s11 + $0x68] sm:$0xff]
    %v1091 = vld [vmem:[%s11 + $0x70] sm:$0xff]
    %v1092 = vld [vmem:[%s11 + $0x78] sm:$0xff]
    %v1093 = vld [vmem:[%s11 + $0x80] sm:$0xff]
    %v1094 = vld [vmem:[%s11 + $0x88] sm:$0xff]
    %v1095 = vld [vmem:[%s11 + $0x90] sm:$0xff]
    %v1096 = vld [vmem:[%s11 + $0x98] sm:$0xff]
    %v1097 = vld [vmem:[%s11 + $0xa0] sm:$0xff]
    %v1098 = vld [vmem:[%s11 + $0xa8] sm:$0xff]
    %v1099 = vld [vmem:[%s11 + $0xb0] sm:$0xff]
    %v1100 = vld [vmem:[%s11 + $0xb8] sm:$0xff]
    %v1101 = vld [vmem:[%s11 + $0xc0] sm:$0xff]
    %v1102 = vld [vmem:[%s11 + $0xc8] sm:$0xff]
    %v1103 = vld [vmem:[%s11 + $0xd0] sm:$0xff]
    %v1104 = vld [vmem:[%s11 + $0xd8] sm:$0xff]
    %v1105 = vld [vmem:[%s11 + $0xe0] sm:$0xff]
    %v1106 = vld [vmem:[%s11 + $0xe8] sm:$0xff]
    %v1107 = vld [vmem:[%s11 + $0xf0] sm:$0xff]
    %v1108 = vld [vmem:[%s11 + $0xf8] sm:$0xff]
    %v1109 = vld [vmem:[%s11 + $0x100] sm:$0xff]
    %v1110 = vld [vmem:[%s11 + $0x108] sm:$0xff]
    %v1111 = vld [vmem:[%s11 + $0x110] sm:$0xff]
    %v1112 = vld [vmem:[%s11 + $0x118] sm:$0xff]
    %v1113 = vld [vmem:[%s11 + $0x120] sm:$0xff]
    %v1114 = vld [vmem:[%s11 + $0x128] sm:$0xff]
    %v1115 = vld [vmem:[%s11 + $0x130] sm:$0xff]
    %v1116 = vld [vmem:[%s11 + $0x138] sm:$0xff]
    %v1117 = vld [vmem:[%s11 + $0x140] sm:$0xff]
    %v1118 = vld [vmem:[%s11 + $0x148] sm:$0xff]
    %v1119 = vld [vmem:[%s11 + $0x150] sm:$0xff]
    %v1120 = vld [vmem:[%s11 + $0x158] sm:$0xff]
    %v1121 = vld [vmem:[%s11 + $0x160] sm:$0xff]
    %v1122 = vld [vmem:[%s11 + $0x168] sm:$0xff]
    %v1123 = vld [vmem:[%s11 + $0x170] sm:$0xff]
    %v1124 = vld [vmem:[%s11 + $0x178] sm:$0xff]
    %v1125 = vld [vmem:[%s11 + $0x180] sm:$0xff]
    %v1126 = vld [vmem:[%s11 + $0x188] sm:$0xff]
    %v1127 = vld [vmem:[%s11 + $0x190] sm:$0xff]
    %v1128 = vld [vmem:[%s11 + $0x198] sm:$0xff]
    %v1129 = vld [vmem:[%s11 + $0x1a0] sm:$0xff]
    %v1130 = vld [vmem:[%s11 + $0x1a8] sm:$0xff]
    %v1131 = vld [vmem:[%s11 + $0x1b0] sm:$0xff]
    %v1132 = vld [vmem:[%s11 + $0x1b8] sm:$0xff]
    %v1133 = vld [vmem:[%s11 + $0x1c0] sm:$0xff]
    %v1134 = vld [vmem:[%s11 + $0x1c8] sm:$0xff]
    %v1135 = vld [vmem:[%s11 + $0x1d0] sm:$0xff]
    %v1136 = vld [vmem:[%s11 + $0x1d8] sm:$0xff]
    %v1137 = vld [vmem:[%s11 + $0x1e0] sm:$0xff]
    %v1138 = vld [vmem:[%s11 + $0x1e8] sm:$0xff]
    %v1139 = vld [vmem:[%s11 + $0x1f0] sm:$0xff]
    %v1140 = vld [vmem:[%s11 + $0x1f8] sm:$0xff]
    %1141 = vmatprep.subr.mxu0 0.0
    %1142 = vmatpush1.msra.mxu0 %v1077
    %1143 = vmatprep.subr.mxu0 0.0
    %1144 = vmatpush1.msra.mxu0 %v1078
    %1145 = vmatprep.subr.mxu0 0.0
    %1146 = vmatpush1.msra.mxu0 %v1079
    %1147 = vmatprep.subr.mxu0 0.0
    %1148 = vmatpush1.msra.mxu0 %v1080
    %1149 = vmatprep.subr.mxu0 0.0
    %1150 = vmatpush1.msra.mxu0 %v1081
    %1151 = vmatprep.subr.mxu0 0.0
    %1152 = vmatpush1.msra.mxu0 %v1082
    %1153 = vmatprep.subr.mxu0 0.0
    %1154 = vmatpush1.msra.mxu0 %v1083
    %1155 = vmatprep.subr.mxu0 0.0
    %1156 = vmatpush1.msra.mxu0 %v1084
    %1157 = vmatprep.subr.mxu0 0.0
    %1158 = vmatpush1.msra.mxu0 %v1085
    %1159 = vmatprep.subr.mxu0 0.0
    %1160 = vmatpush1.msra.mxu0 %v1086
    %1161 = vmatprep.subr.mxu0 0.0
    %1162 = vmatpush1.msra.mxu0 %v1087
    %1163 = vmatprep.subr.mxu0 0.0
    %1164 = vmatpush1.msra.mxu0 %v1088
    %1165 = vmatprep.subr.mxu0 0.0
    %1166 = vmatpush1.msra.mxu0 %v1089
    %1167 = vmatprep.subr.mxu0 0.0
    %1168 = vmatpush1.msra.mxu0 %v1090
    %1169 = vmatprep.subr.mxu0 0.0
    %1170 = vmatpush1.msra.mxu0 %v1091
    %1171 = vmatprep.subr.mxu0 0.0
    %1172 = vmatpush1.msra.mxu0 %v1092
    %1173 = vmatprep.subr.mxu0 0.0
    %1174 = vmatpush1.msra.mxu0 %v1093
    %1175 = vmatprep.subr.mxu0 0.0
    %1176 = vmatpush1.msra.mxu0 %v1094
    %1177 = vmatprep.subr.mxu0 0.0
    %1178 = vmatpush1.msra.mxu0 %v1095
    %1179 = vmatprep.subr.mxu0 0.0
    %1180 = vmatpush1.msra.mxu0 %v1096
    %1181 = vmatprep.subr.mxu0 0.0
    %1182 = vmatpush1.msra.mxu0 %v1097
    %1183 = vmatprep.subr.mxu0 0.0
    %1184 = vmatpush1.msra.mxu0 %v1098
    %1185 = vmatprep.subr.mxu0 0.0
    %1186 = vmatpush1.msra.mxu0 %v1099
    %1187 = vmatprep.subr.mxu0 0.0
    %1188 = vmatpush1.msra.mxu0 %v1100
    %1189 = vmatprep.subr.mxu0 0.0
    %1190 = vmatpush1.msra.mxu0 %v1101
    %1191 = vmatprep.subr.mxu0 0.0
    %1192 = vmatpush1.msra.mxu0 %v1102
    %1193 = vmatprep.subr.mxu0 0.0
    %1194 = vmatpush1.msra.mxu0 %v1103
    %1195 = vmatprep.subr.mxu0 0.0
    %1196 = vmatpush1.msra.mxu0 %v1104
    %1197 = vmatprep.subr.mxu0 0.0
    %1198 = vmatpush1.msra.mxu0 %v1105
    %1199 = vmatprep.subr.mxu0 0.0
    %1200 = vmatpush1.msra.mxu0 %v1106
    %1201 = vmatprep.subr.mxu0 0.0
    %1202 = vmatpush1.msra.mxu0 %v1107
    %1203 = vmatprep.subr.mxu0 0.0
    %1204 = vmatpush1.msra.mxu0 %v1108
    %1205 = vmatprep.mubr.f32.mxu0 %v1074
    %1206 = vmatmul.mubr.f32.gmra.mrb[0].mxu0 %v1073
    %v1207 = vpop.f32.mrb[0].mxu0
    %v1208 = vadd.f32 0.0, %v1207
    %v1209 = vpop.f32.mrb[0].mxu0
    %1210 = vdwg.mxu0
    %1211 = vmatprep.subr.mxu0 0.0
    %1212 = vmatpush1.msra.mxu0 %v1109
    %1213 = vmatprep.subr.mxu0 0.0
    %1214 = vmatpush1.msra.mxu0 %v1110
    %1215 = vmatprep.subr.mxu0 0.0
    %1216 = vmatpush1.msra.mxu0 %v1111
    %1217 = vmatprep.subr.mxu0 0.0
    %1218 = vmatpush1.msra.mxu0 %v1112
    %1219 = vmatprep.subr.mxu0 0.0
    %1220 = vmatpush1.msra.mxu0 %v1113
    %1221 = vmatprep.subr.mxu0 0.0
    %1222 = vmatpush1.msra.mxu0 %v1114
    %1223 = vmatprep.subr.mxu0 0.0
    %1224 = vmatpush1.msra.mxu0 %v1115
    %1225 = vmatprep.subr.mxu0 0.0
    %1226 = vmatpush1.msra.mxu0 %v1116
    %1227 = vmatprep.subr.mxu0 0.0
    %1228 = vmatpush1.msra.mxu0 %v1117
    %1229 = vmatprep.subr.mxu0 0.0
    %1230 = vmatpush1.msra.mxu0 %v1118
    %1231 = vmatprep.subr.mxu0 0.0
    %1232 = vmatpush1.msra.mxu0 %v1119
    %1233 = vmatprep.subr.mxu0 0.0
    %1234 = vmatpush1.msra.mxu0 %v1120
    %1235 = vmatprep.subr.mxu0 0.0
    %1236 = vmatpush1.msra.mxu0 %v1121
    %1237 = vmatprep.subr.mxu0 0.0
    %1238 = vmatpush1.msra.mxu0 %v1122
    %1239 = vmatprep.subr.mxu0 0.0
    %1240 = vmatpush1.msra.mxu0 %v1123
    %1241 = vmatprep.subr.mxu0 0.0
    %1242 = vmatpush1.msra.mxu0 %v1124
    %1243 = vmatprep.subr.mxu0 0.0
    %1244 = vmatpush1.msra.mxu0 %v1125
    %1245 = vmatprep.subr.mxu0 0.0
    %1246 = vmatpush1.msra.mxu0 %v1126
    %1247 = vmatprep.subr.mxu0 0.0
    %1248 = vmatpush1.msra.mxu0 %v1127
    %1249 = vmatprep.subr.mxu0 0.0
    %1250 = vmatpush1.msra.mxu0 %v1128
    %1251 = vmatprep.subr.mxu0 0.0
    %1252 = vmatpush1.msra.mxu0 %v1129
    %1253 = vmatprep.subr.mxu0 0.0
    %1254 = vmatpush1.msra.mxu0 %v1130
    %1255 = vmatprep.subr.mxu0 0.0
    %1256 = vmatpush1.msra.mxu0 %v1131
    %1257 = vmatprep.subr.mxu0 0.0
    %1258 = vmatpush1.msra.mxu0 %v1132
    %1259 = vmatprep.subr.mxu0 0.0
    %1260 = vmatpush1.msra.mxu0 %v1133
    %1261 = vmatprep.subr.mxu0 0.0
    %1262 = vmatpush1.msra.mxu0 %v1134
    %1263 = vmatprep.subr.mxu0 0.0
    %1264 = vmatpush1.msra.mxu0 %v1135
    %1265 = vmatprep.subr.mxu0 0.0
    %1266 = vmatpush1.msra.mxu0 %v1136
    %1267 = vmatprep.subr.mxu0 0.0
    %1268 = vmatpush1.msra.mxu0 %v1137
    %1269 = vmatprep.subr.mxu0 0.0
    %1270 = vmatpush1.msra.mxu0 %v1138
    %1271 = vmatprep.subr.mxu0 0.0
    %1272 = vmatpush1.msra.mxu0 %v1139
    %1273 = vmatprep.subr.mxu0 0.0
    %1274 = vmatpush1.msra.mxu0 %v1140
    %1275 = vmatprep.mubr.f32.mxu0 %v1076
    %1276 = vmatmul.mubr.f32.gmra.mrb[0].mxu0 %v1075
    %v1277 = vpop.f32.mrb[0].mxu0
    %v1278 = vadd.f32 %v1208, %v1277
    %v1279 = vpop.f32.mrb[0].mxu0
    %1280 = vdwg.mxu0
    %1281 = vst [vmem:[%s12] sm:$0xff] %v1278
    // Predicated region
    $region66: #{rainbow_forward.1} parent=1 // pred_check
      _
    $region67: #{rainbow_forward.1} parent=1 // pred_check_branch
      %1283 = sbr.rel (0) target = $region69
    $region68: #{rainbow_forward.1} parent=1 // pred_region
      _
    $region69: #{rainbow_forward.1} parent=1 // pred_fallthru
      _
    // Predicated region
    $region70: #{rainbow_forward.1} parent=1 // pred_check
      _
    $region71: #{rainbow_forward.1} parent=1 // pred_check_branch
      %1285 = sbr.rel (0) target = $region73
    $region72: #{rainbow_forward.1} parent=1 // pred_region
      _
    $region73: #{rainbow_forward.1} parent=1 // pred_fallthru
      _
    %1286 = vsyncpa [#allocation3], 1
    %1287 = vsyncpa [#allocation5], 1
    %1288 = vsyncpa [#allocation8], 1

</llo_original>
